<compile_context>
chip_gen: v5e
topology: v5e:2x2
jax: 0.10.0
libtpu: 0.0.40
codegen_flags: <defaults>
</compile_context>

<pallas_src>
import functools

import numpy as np
import jax
import jax.numpy as jnp
from jax.experimental import pallas as pl
from jax.experimental.pallas import tpu as pltpu


# ----------------------------------------------------------------------------
# Anchor utilities (pure numpy glue, identical semantics to the PyTorch code)
# ----------------------------------------------------------------------------
def generate_anchor_base(base_size=16, ratios=(0.5, 1, 2), anchor_scales=(8, 16, 32)):
    py = base_size / 2.0
    px = base_size / 2.0
    anchor_base = np.zeros((len(ratios) * len(anchor_scales), 4), dtype=np.float32)
    for i in range(len(ratios)):
        for j in range(len(anchor_scales)):
            h = base_size * anchor_scales[j] * np.sqrt(ratios[i])
            w = base_size * anchor_scales[j] * np.sqrt(1.0 / ratios[i])
            idx = i * len(anchor_scales) + j
            anchor_base[idx, 0] = py - h / 2.0
            anchor_base[idx, 1] = px - w / 2.0
            anchor_base[idx, 2] = py + h / 2.0
            anchor_base[idx, 3] = px + w / 2.0
    return anchor_base


def _enumerate_shifted_anchor(anchor_base, feat_stride, height, width):
    shift_y = np.arange(0, height * feat_stride, feat_stride)
    shift_x = np.arange(0, width * feat_stride, feat_stride)
    shift_x, shift_y = np.meshgrid(shift_x, shift_y)
    shift = np.stack(
        (shift_y.ravel(), shift_x.ravel(), shift_y.ravel(), shift_x.ravel()), axis=1
    )
    A = anchor_base.shape[0]
    K = shift.shape[0]
    anchor = anchor_base.reshape((1, A, 4)) + shift.reshape((1, K, 4)).transpose((1, 0, 2))
    anchor = anchor.reshape((K * A, 4)).astype(np.float32)
    return anchor


def _round_up(x, m):
    return ((x + m - 1) // m) * m


# ----------------------------------------------------------------------------
# Pallas kernel: one (batch, row-tile) cell per grid step
# ----------------------------------------------------------------------------
def rpn_kernel(xs_ref, w1_ref, b1_ref, wh_ref, bh_ref, out_ref, *, tile_h, W, A):
    """xs_ref : (1, tile_h+2, W+2, Cin)   bf16 halo'd input slab
       w1_ref : (9, Cin, Cmid)            bf16 conv1 weight, tap-major
       b1_ref : (1, Cmid)                 f32
       wh_ref : (Cmid, OUT_W - A)         bf16 fused [loc | bg | fg | zero-pad]
       bh_ref : (1, OUT_W - A)            f32
       out_ref: (1, tile_h*W, OUT_W)      f32 [loc | bg | fg | pad | fg_prob]
    """
    cmid = w1_ref.shape[2]
    tile_hw = tile_h * W

    # 3x3 conv as 9 shifted bf16 matmuls accumulated in f32 (MXU, f32 acc).
    # Static Python unroll -> full LLO scheduler visibility.
    acc = jnp.zeros((tile_hw, cmid), jnp.float32)
    for k in range(9):
        ky, kx = divmod(k, 3)
        patch = xs_ref[0, ky:ky + tile_h, kx:kx + W, :]          # (tile_h, W, Cin) bf16
        patch = patch.reshape(tile_hw, patch.shape[-1])          # (tile_hw, Cin)
        acc = acc + jnp.dot(patch, w1_ref[k],
                            preferred_element_type=jnp.float32)

    h = jnp.maximum(acc + b1_ref[...], 0.0)                      # f32 (tile_hw, Cmid)

    # Fused loc+score head: one bf16 matmul (columns zero-padded to OUT_W - A,
    # free on the MXU) with f32 accumulation.
    head = jnp.dot(h.astype(jnp.bfloat16), wh_ref[...],
                   preferred_element_type=jnp.float32) + bh_ref[...]   # (tile_hw, OUT_W-A)

    # softmax foreground prob = sigmoid(s_fg - s_bg): pure VPU/EUP, no matmul.
    bg = head[:, 4 * A:5 * A]
    fg = head[:, 5 * A:6 * A]
    prob = 1.0 / (1.0 + jnp.exp(bg - fg))                        # (tile_hw, A)

    # Single lane-dense (multiple of 128 lanes) write-back slab -> unmasked vst.
    out_ref[0] = jnp.concatenate([head, prob], axis=-1).astype(out_ref.dtype)


def rpn_head_pallas(x_nchw, params, tile_h=None):
    """Runs conv1+relu, loc, score, fg-softmax on TPU via Pallas.

    Returns (locs, scores, fg_prob) in NHWC layout:
      locs:    (N, H, W, 4*A)
      scores:  (N, H, W, 2*A)   channel order (a0_bg, a0_fg, a1_bg, ...) as in PyTorch
      fg_prob: (N, H, W, A)
    """
    N, Cin, H, W = x_nchw.shape
    Cmid = params["b1"].shape[0]
    A = params["bs"].shape[0] // 2

    # Lane-dense fused output width (>= 7A, multiple of 128).
    OUT_W = max(128, _round_up(7 * A, 128))
    head_w = OUT_W - A                      # matmul columns: [loc|bg|fg|zero-pad]

    if tile_h is None:
        tile_h = max(1, 512 // max(W, 1))   # aim for ~512 output rows per tile
    tile_h = max(1, min(tile_h, H))
    T = -(-H // tile_h)                     # cdiv
    Hp = T * tile_h
    tile_hw = tile_h * W

    # ---- glue: NCHW -> NHWC bf16, spatial pad (+extra rows so H | tile_h) ----
    x = jnp.transpose(x_nchw, (0, 2, 3, 1)).astype(jnp.bfloat16)      # (N,H,W,Cin)
    xp = jnp.pad(x, ((0, 0), (1, 1 + (Hp - H)), (1, 1), (0, 0)))      # (N,Hp+2,W+2,Cin)

    # Halo'd row slabs: only the 2 halo rows per tile are duplicated (vs 9x im2col).
    slabs = [xp[:, t * tile_h:t * tile_h + tile_h + 2] for t in range(T)]
    xs = jnp.stack(slabs, axis=1).reshape(N * T, tile_h + 2, W + 2, Cin)

    # ---- glue: weights to matmul form (bf16 operands, f32 biases) -------------
    # conv1 weight: (Cmid, Cin, 3, 3) -> (3,3,Cin,Cmid) -> (9, Cin, Cmid)
    w1m = jnp.transpose(params["w1"], (2, 3, 1, 0)).reshape(9, Cin, Cmid)
    w1m = w1m.astype(jnp.bfloat16)
    b1 = params["b1"].reshape(1, Cmid).astype(jnp.float32)

    # fused head weight: columns = [loc (4A) | score_bg (A) | score_fg (A) | 0-pad]
    wl = params["wl"].reshape(4 * A, Cmid)
    ws = params["ws"].reshape(2 * A, Cmid)
    whead = jnp.concatenate([wl.T, ws[0::2].T, ws[1::2].T], axis=1)
    whead = jnp.pad(whead, ((0, 0), (0, head_w - 6 * A))).astype(jnp.bfloat16)
    bhead = jnp.concatenate(
        [params["bl"], params["bs"][0::2], params["bs"][1::2]]
    )
    bhead = jnp.pad(bhead, (0, head_w - 6 * A)).reshape(1, head_w).astype(jnp.float32)

    grid_spec = pltpu.PrefetchScalarGridSpec(
        num_scalar_prefetch=0,
        grid=(N, T),
        in_specs=[
            pl.BlockSpec((1, tile_h + 2, W + 2, Cin), lambda b, t: (b * T + t, 0, 0, 0)),
            pl.BlockSpec((9, Cin, Cmid), lambda b, t: (0, 0, 0)),
            pl.BlockSpec((1, Cmid), lambda b, t: (0, 0)),
            pl.BlockSpec((Cmid, head_w), lambda b, t: (0, 0)),
            pl.BlockSpec((1, head_w), lambda b, t: (0, 0)),
        ],
        out_specs=pl.BlockSpec((1, tile_hw, OUT_W), lambda b, t: (b * T + t, 0, 0)),
    )

    out = pl.pallas_call(
        functools.partial(rpn_kernel, tile_h=tile_h, W=W, A=A),
        out_shape=jax.ShapeDtypeStruct((N * T, tile_hw, OUT_W), jnp.float32),
        grid_spec=grid_spec,
        compiler_params=pltpu.CompilerParams(
            dimension_semantics=("parallel", "parallel"),
            vmem_limit_bytes=48 * 1024 * 1024,
        ),
    )(xs, w1m, b1, whead, bhead)

    # Split the fused slab back into module-layout tensors.
    out = out.reshape(N, T * tile_h, W, OUT_W)[:, :H]                 # (N,H,W,OUT_W)
    locs = out[..., :4 * A]
    bg = out[..., 4 * A:5 * A]
    fg = out[..., 5 * A:6 * A]
    prob = out[..., OUT_W - A:OUT_W]
    # restore interleaved (anchor, bg/fg) channel order of the PyTorch score conv
    scores = jnp.stack([bg, fg], axis=-1).reshape(N, H, W, 2 * A)
    return locs, scores, prob


# ----------------------------------------------------------------------------
# Full RPN forward matching the PyTorch module's return convention
# ----------------------------------------------------------------------------
def rpn_forward(x_nchw, params, anchor_base, feat_stride, img_size, scale=1.0,
                tile_h=None):
    N, _, H, W = x_nchw.shape
    anchor = _enumerate_shifted_anchor(np.asarray(anchor_base), feat_stride, H, W)
    A = anchor.shape[0] // (H * W)

    locs_hw, scores_hw, fg_hw = rpn_head_pallas(x_nchw, params, tile_h=tile_h)

    # raw conv outputs in NCHW (what PyTorch's self.loc(h) / self.score(h) give)
    raw_rpn_locs = jnp.transpose(locs_hw, (0, 3, 1, 2))
    raw_rpn_scores = jnp.transpose(scores_hw, (0, 3, 1, 2))

    rpn_locs = locs_hw.reshape(N, H * W * A, 4)
    rpn_scores = scores_hw.reshape(N, H * W * A, 2)
    rpn_fg_scores = fg_hw.reshape(N, H * W * A)   # computed in-kernel (softmax fg)

    # TODO(synk): ProposalCreator (bbox decode + clip + score sort + NMS with a
    # data-dependent number of proposals) has no clean Pallas equivalent;
    # returning empty rois / roi_indices.
    rois = np.zeros((0, 4), dtype=np.float32)
    roi_indices = np.zeros((0,), dtype=np.int32)

    return (rpn_locs, rpn_scores, rois, roi_indices, anchor,
            raw_rpn_locs, raw_rpn_scores, rpn_fg_scores)


# ----------------------------------------------------------------------------
# Plain-JAX reference (lax.conv) for verification.  Inputs/weights are rounded
# through bf16 (as the kernel's MXU operands are) so tolerances can stay tight.
# ----------------------------------------------------------------------------
def rpn_reference(x_nchw, params):
    rd = lambda a: a.astype(jnp.bfloat16).astype(jnp.float32)
    dn = ("NCHW", "OIHW", "NCHW")
    hp = jax.lax.Precision.HIGHEST
    h = jax.lax.conv_general_dilated(
        rd(x_nchw), rd(params["w1"]), (1, 1), ((1, 1), (1, 1)),
        dimension_numbers=dn, precision=hp
    ) + params["b1"][None, :, None, None]
    h = jnp.maximum(h, 0.0)
    h = rd(h)
    loc = jax.lax.conv_general_dilated(
        h, rd(params["wl"]), (1, 1), ((0, 0), (0, 0)),
        dimension_numbers=dn, precision=hp
    ) + params["bl"][None, :, None, None]
    sc = jax.lax.conv_general_dilated(
        h, rd(params["ws"]), (1, 1), ((0, 0), (0, 0)),
        dimension_numbers=dn, precision=hp
    ) + params["bs"][None, :, None, None]
    N, _, H, W = x_nchw.shape
    A = params["bs"].shape[0] // 2
    loc_nhwc = jnp.transpose(loc, (0, 2, 3, 1)).reshape(N, H * W * A, 4)
    sc_nhwc = jnp.transpose(sc, (0, 2, 3, 1)).reshape(N, H, W, A, 2)
    fg = jax.nn.softmax(sc_nhwc, axis=-1)[..., 1].reshape(N, H * W * A)
    return loc_nhwc, sc_nhwc.reshape(N, H * W * A, 2), fg


if __name__ == "__main__":
    # Small but representative shapes (PyTorch defaults scaled down)
    N, Cin, Cmid, H, W = 2, 16, 32, 16, 16
    ratios = [0.5, 1, 2]
    anchor_scales = [8, 16, 32]
    feat_stride = 16
    anchor_base = generate_anchor_base(ratios=ratios, anchor_scales=anchor_scales)
    A = anchor_base.shape[0]  # 9

    key = jax.random.PRNGKey(0)
    kx_, k1, k2, k3, k4, k5, k6 = jax.random.split(key, 7)
    params = {
        "w1": 0.01 * jax.random.normal(k1, (Cmid, Cin, 3, 3), jnp.float32),
        "b1": 0.01 * jax.random.normal(k4, (Cmid,), jnp.float32),
        "wl": 0.01 * jax.random.normal(k2, (4 * A, Cmid, 1, 1), jnp.float32),
        "bl": 0.01 * jax.random.normal(k5, (4 * A,), jnp.float32),
        "ws": 0.01 * jax.random.normal(k3, (2 * A, Cmid, 1, 1), jnp.float32),
        "bs": 0.01 * jax.random.normal(k6, (2 * A,), jnp.float32),
    }

    x = jax.random.normal(kx_, (N, Cin, H, W), jnp.float32)
    img_size = (H * feat_stride, W * feat_stride)

    outs = rpn_forward(x, params, anchor_base, feat_stride, img_size, scale=1.0,
                       tile_h=8)   # -> grid (N=2, T=2), tile_hw = 128
    (rpn_locs, rpn_scores, rois, roi_indices, anchor,
     raw_rpn_locs, raw_rpn_scores, rpn_fg_scores) = outs
    jax.block_until_ready((rpn_locs, rpn_scores, raw_rpn_locs, raw_rpn_scores,
                           rpn_fg_scores))

    # Verify against a plain-JAX reference (bf16-rounded operands, f32 accumulation)
    ref_locs, ref_scores, ref_fg = rpn_reference(x, params)
    np.testing.assert_allclose(np.asarray(rpn_locs), np.asarray(ref_locs),
                               rtol=5e-3, atol=5e-4)
    np.testing.assert_allclose(np.asarray(rpn_scores), np.asarray(ref_scores),
                               rtol=5e-3, atol=5e-4)
    np.testing.assert_allclose(np.asarray(rpn_fg_scores), np.asarray(ref_fg),
                               rtol=5e-3, atol=5e-4)

    assert rpn_locs.shape == (N, H * W * A, 4)
    assert rpn_scores.shape == (N, H * W * A, 2)
    assert anchor.shape == (H * W * A, 4)
    assert raw_rpn_locs.shape == (N, 4 * A, H, W)
    assert raw_rpn_scores.shape == (N, 2 * A, H, W)
    assert rpn_fg_scores.shape == (N, H * W * A)

    print("KERNEL_OK")
</pallas_src>

<mosaic_0001>
module attributes {stable_mosaic.version = 11 : i64} {
  func.func @rpn_kernel(%arg0: i32, %arg1: i32, %arg2: memref<1x10x18x16xbf16, #tpu.memory_space<vmem>>, %arg3: memref<9x16x32xbf16, #tpu.memory_space<vmem>>, %arg4: memref<1x32xf32, #tpu.memory_space<vmem>>, %arg5: memref<32x119xbf16, #tpu.memory_space<vmem>>, %arg6: memref<1x119xf32, #tpu.memory_space<vmem>>, %arg7: memref<1x128x128xf32, #tpu.memory_space<vmem>>) attributes {dimension_semantics = [#tpu.dimension_semantics<parallel>, #tpu.dimension_semantics<parallel>], iteration_bounds = array<i64: 2, 2>, scalar_prefetch = 0 : i64, scratch_operands = 0 : i64, tpu.core_type = #tpu.core_type<tc>, window_params = [{transform_indices = @transform_0, window_bounds = array<i64: 1, 10, 18, 16>}, {pipeline_mode = #tpu.pipeline_mode<synchronous>, transform_indices = @transform_1, window_bounds = array<i64: 9, 16, 32>}, {pipeline_mode = #tpu.pipeline_mode<synchronous>, transform_indices = @transform_2, window_bounds = array<i64: 1, 32>}, {pipeline_mode = #tpu.pipeline_mode<synchronous>, transform_indices = @transform_3, window_bounds = array<i64: 32, 119>}, {pipeline_mode = #tpu.pipeline_mode<synchronous>, transform_indices = @transform_4, window_bounds = array<i64: 1, 119>}, {transform_indices = @transform_5, window_bounds = array<i64: 1, 128, 128>}]} {
    %cst = arith.constant 0.000000e+00 : f32
    %0 = vector.broadcast %cst : f32 to vector<128x32xf32>
    %c0 = arith.constant 0 : index
    %c0_0 = arith.constant 0 : index
    %c0_1 = arith.constant 0 : index
    %c0_2 = arith.constant 0 : index
    %1 = vector.load %arg2[%c0, %c0_0, %c0_1, %c0_2] : memref<1x10x18x16xbf16, #tpu.memory_space<vmem>>, vector<1x8x16x16xbf16>
    %2 = vector.shape_cast %1 : vector<1x8x16x16xbf16> to vector<8x16x16xbf16>
    %3 = vector.shape_cast %2 : vector<8x16x16xbf16> to vector<128x16xbf16>
    %c0_3 = arith.constant 0 : index
    %c0_4 = arith.constant 0 : index
    %c0_5 = arith.constant 0 : index
    %4 = vector.load %arg3[%c0_3, %c0_4, %c0_5] : memref<9x16x32xbf16, #tpu.memory_space<vmem>>, vector<1x16x32xbf16>
    %5 = vector.shape_cast %4 : vector<1x16x32xbf16> to vector<16x32xbf16>
    %cst_6 = arith.constant dense<0.000000e+00> : vector<128x32xf32>
    %6 = tpu.matmul %3, %5, %cst_6 {dimension_numbers = #tpu.dot_dimension_numbers<[1], [0], [0], [1], [0, 0, 1, 1], [], []>} : vector<128x16xbf16>, vector<16x32xbf16>, vector<128x32xf32> -> vector<128x32xf32>
    %7 = arith.addf %0, %6 : vector<128x32xf32>
    %c0_7 = arith.constant 0 : index
    %c0_8 = arith.constant 0 : index
    %c1 = arith.constant 1 : index
    %c0_9 = arith.constant 0 : index
    %8 = vector.load %arg2[%c0_7, %c0_8, %c1, %c0_9] : memref<1x10x18x16xbf16, #tpu.memory_space<vmem>>, vector<1x8x16x16xbf16>
    %9 = vector.shape_cast %8 : vector<1x8x16x16xbf16> to vector<8x16x16xbf16>
    %10 = vector.shape_cast %9 : vector<8x16x16xbf16> to vector<128x16xbf16>
    %c1_10 = arith.constant 1 : index
    %c0_11 = arith.constant 0 : index
    %c0_12 = arith.constant 0 : index
    %11 = vector.load %arg3[%c1_10, %c0_11, %c0_12] : memref<9x16x32xbf16, #tpu.memory_space<vmem>>, vector<1x16x32xbf16>
    %12 = vector.shape_cast %11 : vector<1x16x32xbf16> to vector<16x32xbf16>
    %cst_13 = arith.constant dense<0.000000e+00> : vector<128x32xf32>
    %13 = tpu.matmul %10, %12, %cst_13 {dimension_numbers = #tpu.dot_dimension_numbers<[1], [0], [0], [1], [0, 0, 1, 1], [], []>} : vector<128x16xbf16>, vector<16x32xbf16>, vector<128x32xf32> -> vector<128x32xf32>
    %14 = arith.addf %7, %13 : vector<128x32xf32>
    %c0_14 = arith.constant 0 : index
    %c0_15 = arith.constant 0 : index
    %c2 = arith.constant 2 : index
    %c0_16 = arith.constant 0 : index
    %15 = vector.load %arg2[%c0_14, %c0_15, %c2, %c0_16] : memref<1x10x18x16xbf16, #tpu.memory_space<vmem>>, vector<1x8x16x16xbf16>
    %16 = vector.shape_cast %15 : vector<1x8x16x16xbf16> to vector<8x16x16xbf16>
    %17 = vector.shape_cast %16 : vector<8x16x16xbf16> to vector<128x16xbf16>
    %c2_17 = arith.constant 2 : index
    %c0_18 = arith.constant 0 : index
    %c0_19 = arith.constant 0 : index
    %18 = vector.load %arg3[%c2_17, %c0_18, %c0_19] : memref<9x16x32xbf16, #tpu.memory_space<vmem>>, vector<1x16x32xbf16>
    %19 = vector.shape_cast %18 : vector<1x16x32xbf16> to vector<16x32xbf16>
    %cst_20 = arith.constant dense<0.000000e+00> : vector<128x32xf32>
    %20 = tpu.matmul %17, %19, %cst_20 {dimension_numbers = #tpu.dot_dimension_numbers<[1], [0], [0], [1], [0, 0, 1, 1], [], []>} : vector<128x16xbf16>, vector<16x32xbf16>, vector<128x32xf32> -> vector<128x32xf32>
    %21 = arith.addf %14, %20 : vector<128x32xf32>
    %c0_21 = arith.constant 0 : index
    %c1_22 = arith.constant 1 : index
    %c0_23 = arith.constant 0 : index
    %c0_24 = arith.constant 0 : index
    %22 = vector.load %arg2[%c0_21, %c1_22, %c0_23, %c0_24] : memref<1x10x18x16xbf16, #tpu.memory_space<vmem>>, vector<1x8x16x16xbf16>
    %23 = vector.shape_cast %22 : vector<1x8x16x16xbf16> to vector<8x16x16xbf16>
    %24 = vector.shape_cast %23 : vector<8x16x16xbf16> to vector<128x16xbf16>
    %c3 = arith.constant 3 : index
    %c0_25 = arith.constant 0 : index
    %c0_26 = arith.constant 0 : index
    %25 = vector.load %arg3[%c3, %c0_25, %c0_26] : memref<9x16x32xbf16, #tpu.memory_space<vmem>>, vector<1x16x32xbf16>
    %26 = vector.shape_cast %25 : vector<1x16x32xbf16> to vector<16x32xbf16>
    %cst_27 = arith.constant dense<0.000000e+00> : vector<128x32xf32>
    %27 = tpu.matmul %24, %26, %cst_27 {dimension_numbers = #tpu.dot_dimension_numbers<[1], [0], [0], [1], [0, 0, 1, 1], [], []>} : vector<128x16xbf16>, vector<16x32xbf16>, vector<128x32xf32> -> vector<128x32xf32>
    %28 = arith.addf %21, %27 : vector<128x32xf32>
    %c0_28 = arith.constant 0 : index
    %c1_29 = arith.constant 1 : index
    %c1_30 = arith.constant 1 : index
    %c0_31 = arith.constant 0 : index
    %29 = vector.load %arg2[%c0_28, %c1_29, %c1_30, %c0_31] : memref<1x10x18x16xbf16, #tpu.memory_space<vmem>>, vector<1x8x16x16xbf16>
    %30 = vector.shape_cast %29 : vector<1x8x16x16xbf16> to vector<8x16x16xbf16>
    %31 = vector.shape_cast %30 : vector<8x16x16xbf16> to vector<128x16xbf16>
    %c4 = arith.constant 4 : index
    %c0_32 = arith.constant 0 : index
    %c0_33 = arith.constant 0 : index
    %32 = vector.load %arg3[%c4, %c0_32, %c0_33] : memref<9x16x32xbf16, #tpu.memory_space<vmem>>, vector<1x16x32xbf16>
    %33 = vector.shape_cast %32 : vector<1x16x32xbf16> to vector<16x32xbf16>
    %cst_34 = arith.constant dense<0.000000e+00> : vector<128x32xf32>
    %34 = tpu.matmul %31, %33, %cst_34 {dimension_numbers = #tpu.dot_dimension_numbers<[1], [0], [0], [1], [0, 0, 1, 1], [], []>} : vector<128x16xbf16>, vector<16x32xbf16>, vector<128x32xf32> -> vector<128x32xf32>
    %35 = arith.addf %28, %34 : vector<128x32xf32>
    %c0_35 = arith.constant 0 : index
    %c1_36 = arith.constant 1 : index
    %c2_37 = arith.constant 2 : index
    %c0_38 = arith.constant 0 : index
    %36 = vector.load %arg2[%c0_35, %c1_36, %c2_37, %c0_38] : memref<1x10x18x16xbf16, #tpu.memory_space<vmem>>, vector<1x8x16x16xbf16>
    %37 = vector.shape_cast %36 : vector<1x8x16x16xbf16> to vector<8x16x16xbf16>
    %38 = vector.shape_cast %37 : vector<8x16x16xbf16> to vector<128x16xbf16>
    %c5 = arith.constant 5 : index
    %c0_39 = arith.constant 0 : index
    %c0_40 = arith.constant 0 : index
    %39 = vector.load %arg3[%c5, %c0_39, %c0_40] : memref<9x16x32xbf16, #tpu.memory_space<vmem>>, vector<1x16x32xbf16>
    %40 = vector.shape_cast %39 : vector<1x16x32xbf16> to vector<16x32xbf16>
    %cst_41 = arith.constant dense<0.000000e+00> : vector<128x32xf32>
    %41 = tpu.matmul %38, %40, %cst_41 {dimension_numbers = #tpu.dot_dimension_numbers<[1], [0], [0], [1], [0, 0, 1, 1], [], []>} : vector<128x16xbf16>, vector<16x32xbf16>, vector<128x32xf32> -> vector<128x32xf32>
    %42 = arith.addf %35, %41 : vector<128x32xf32>
    %c0_42 = arith.constant 0 : index
    %c2_43 = arith.constant 2 : index
    %c0_44 = arith.constant 0 : index
    %c0_45 = arith.constant 0 : index
    %43 = vector.load %arg2[%c0_42, %c2_43, %c0_44, %c0_45] : memref<1x10x18x16xbf16, #tpu.memory_space<vmem>>, vector<1x8x16x16xbf16>
    %44 = vector.shape_cast %43 : vector<1x8x16x16xbf16> to vector<8x16x16xbf16>
    %45 = vector.shape_cast %44 : vector<8x16x16xbf16> to vector<128x16xbf16>
    %c6 = arith.constant 6 : index
    %c0_46 = arith.constant 0 : index
    %c0_47 = arith.constant 0 : index
    %46 = vector.load %arg3[%c6, %c0_46, %c0_47] : memref<9x16x32xbf16, #tpu.memory_space<vmem>>, vector<1x16x32xbf16>
    %47 = vector.shape_cast %46 : vector<1x16x32xbf16> to vector<16x32xbf16>
    %cst_48 = arith.constant dense<0.000000e+00> : vector<128x32xf32>
    %48 = tpu.matmul %45, %47, %cst_48 {dimension_numbers = #tpu.dot_dimension_numbers<[1], [0], [0], [1], [0, 0, 1, 1], [], []>} : vector<128x16xbf16>, vector<16x32xbf16>, vector<128x32xf32> -> vector<128x32xf32>
    %49 = arith.addf %42, %48 : vector<128x32xf32>
    %c0_49 = arith.constant 0 : index
    %c2_50 = arith.constant 2 : index
    %c1_51 = arith.constant 1 : index
    %c0_52 = arith.constant 0 : index
    %50 = vector.load %arg2[%c0_49, %c2_50, %c1_51, %c0_52] : memref<1x10x18x16xbf16, #tpu.memory_space<vmem>>, vector<1x8x16x16xbf16>
    %51 = vector.shape_cast %50 : vector<1x8x16x16xbf16> to vector<8x16x16xbf16>
    %52 = vector.shape_cast %51 : vector<8x16x16xbf16> to vector<128x16xbf16>
    %c7 = arith.constant 7 : index
    %c0_53 = arith.constant 0 : index
    %c0_54 = arith.constant 0 : index
    %53 = vector.load %arg3[%c7, %c0_53, %c0_54] : memref<9x16x32xbf16, #tpu.memory_space<vmem>>, vector<1x16x32xbf16>
    %54 = vector.shape_cast %53 : vector<1x16x32xbf16> to vector<16x32xbf16>
    %cst_55 = arith.constant dense<0.000000e+00> : vector<128x32xf32>
    %55 = tpu.matmul %52, %54, %cst_55 {dimension_numbers = #tpu.dot_dimension_numbers<[1], [0], [0], [1], [0, 0, 1, 1], [], []>} : vector<128x16xbf16>, vector<16x32xbf16>, vector<128x32xf32> -> vector<128x32xf32>
    %56 = arith.addf %49, %55 : vector<128x32xf32>
    %c0_56 = arith.constant 0 : index
    %c2_57 = arith.constant 2 : index
    %c2_58 = arith.constant 2 : index
    %c0_59 = arith.constant 0 : index
    %57 = vector.load %arg2[%c0_56, %c2_57, %c2_58, %c0_59] : memref<1x10x18x16xbf16, #tpu.memory_space<vmem>>, vector<1x8x16x16xbf16>
    %58 = vector.shape_cast %57 : vector<1x8x16x16xbf16> to vector<8x16x16xbf16>
    %59 = vector.shape_cast %58 : vector<8x16x16xbf16> to vector<128x16xbf16>
    %c8 = arith.constant 8 : index
    %c0_60 = arith.constant 0 : index
    %c0_61 = arith.constant 0 : index
    %60 = vector.load %arg3[%c8, %c0_60, %c0_61] : memref<9x16x32xbf16, #tpu.memory_space<vmem>>, vector<1x16x32xbf16>
    %61 = vector.shape_cast %60 : vector<1x16x32xbf16> to vector<16x32xbf16>
    %cst_62 = arith.constant dense<0.000000e+00> : vector<128x32xf32>
    %62 = tpu.matmul %59, %61, %cst_62 {dimension_numbers = #tpu.dot_dimension_numbers<[1], [0], [0], [1], [0, 0, 1, 1], [], []>} : vector<128x16xbf16>, vector<16x32xbf16>, vector<128x32xf32> -> vector<128x32xf32>
    %63 = arith.addf %56, %62 : vector<128x32xf32>
    %c0_63 = arith.constant 0 : index
    %c0_64 = arith.constant 0 : index
    %64 = vector.load %arg4[%c0_63, %c0_64] : memref<1x32xf32, #tpu.memory_space<vmem>>, vector<1x32xf32>
    %65 = vector.broadcast %64 : vector<1x32xf32> to vector<128x32xf32>
    %66 = arith.addf %63, %65 : vector<128x32xf32>
    %cst_65 = arith.constant 0.000000e+00 : f32
    %67 = vector.broadcast %cst_65 : f32 to vector<128x32xf32>
    %68 = arith.maximumf %66, %67 : vector<128x32xf32>
    %69 = arith.truncf %68 : vector<128x32xf32> to vector<128x32xbf16>
    %c0_66 = arith.constant 0 : index
    %c0_67 = arith.constant 0 : index
    %70 = vector.load %arg5[%c0_66, %c0_67] : memref<32x119xbf16, #tpu.memory_space<vmem>>, vector<32x119xbf16>
    %cst_68 = arith.constant dense<0.000000e+00> : vector<128x119xf32>
    %71 = tpu.matmul %69, %70, %cst_68 {dimension_numbers = #tpu.dot_dimension_numbers<[1], [0], [0], [1], [0, 0, 1, 1], [], []>} : vector<128x32xbf16>, vector<32x119xbf16>, vector<128x119xf32> -> vector<128x119xf32>
    %c0_69 = arith.constant 0 : index
    %c0_70 = arith.constant 0 : index
    %72 = vector.load %arg6[%c0_69, %c0_70] : memref<1x119xf32, #tpu.memory_space<vmem>>, vector<1x119xf32>
    %73 = vector.broadcast %72 : vector<1x119xf32> to vector<128x119xf32>
    %74 = arith.addf %71, %73 : vector<128x119xf32>
    %75 = vector.extract_strided_slice %74 {offsets = [0, 36], sizes = [128, 9], strides = [1, 1]} : vector<128x119xf32> to vector<128x9xf32>
    %76 = vector.extract_strided_slice %74 {offsets = [0, 45], sizes = [128, 9], strides = [1, 1]} : vector<128x119xf32> to vector<128x9xf32>
    %77 = arith.subf %75, %76 : vector<128x9xf32>
    %78 = math.exp %77 : vector<128x9xf32>
    %cst_71 = arith.constant 1.000000e+00 : f32
    %79 = vector.broadcast %cst_71 : f32 to vector<128x9xf32>
    %80 = arith.addf %79, %78 : vector<128x9xf32>
    %cst_72 = arith.constant 1.000000e+00 : f32
    %81 = vector.broadcast %cst_72 : f32 to vector<128x9xf32>
    %82 = arith.divf %81, %80 : vector<128x9xf32>
    %83 = tpu.concatenate %74, %82 in 1 : vector<128x119xf32>, vector<128x9xf32> -> vector<128x128xf32>
    %c0_73 = arith.constant 0 : index
    %c0_74 = arith.constant 0 : index
    %c0_75 = arith.constant 0 : index
    %84 = vector.load %arg7[%c0_73, %c0_74, %c0_75] : memref<1x128x128xf32, #tpu.memory_space<vmem>>, vector<1x128x128xf32>
    %85 = vector.shape_cast %84 : vector<1x128x128xf32> to vector<128x128xf32>
    %86 = vector.shape_cast %83 : vector<128x128xf32> to vector<1x128x128xf32>
    tpu.vector_store %arg7[%c0_73, %c0_74, %c0_75], %86 {strides = array<i32>} : memref<1x128x128xf32, #tpu.memory_space<vmem>>, vector<1x128x128xf32>,
    return
  }
  func.func @transform_0(%arg0: i32, %arg1: i32) -> (i32, i32, i32, i32) {
    %c2_i32 = arith.constant 2 : i32
    %0 = arith.muli %arg0, %c2_i32 : i32
    %1 = arith.addi %0, %arg1 : i32
    %c0_i32 = arith.constant 0 : i32
    %c0_i32_0 = arith.constant 0 : i32
    %c0_i32_1 = arith.constant 0 : i32
    %c0_i32_2 = arith.constant 0 : i32
    return %1, %c0_i32, %c0_i32_0, %c0_i32_1 : i32, i32, i32, i32
  }
  func.func @transform_1(%arg0: i32, %arg1: i32) -> (i32, i32, i32) {
    %c0_i32 = arith.constant 0 : i32
    %c0_i32_0 = arith.constant 0 : i32
    %c0_i32_1 = arith.constant 0 : i32
    %c0_i32_2 = arith.constant 0 : i32
    return %c0_i32, %c0_i32_0, %c0_i32_1 : i32, i32, i32
  }
  func.func @transform_2(%arg0: i32, %arg1: i32) -> (i32, i32) {
    %c0_i32 = arith.constant 0 : i32
    %c0_i32_0 = arith.constant 0 : i32
    %c0_i32_1 = arith.constant 0 : i32
    return %c0_i32, %c0_i32_0 : i32, i32
  }
  func.func @transform_3(%arg0: i32, %arg1: i32) -> (i32, i32) {
    %c0_i32 = arith.constant 0 : i32
    %c0_i32_0 = arith.constant 0 : i32
    %c0_i32_1 = arith.constant 0 : i32
    return %c0_i32, %c0_i32_0 : i32, i32
  }
  func.func @transform_4(%arg0: i32, %arg1: i32) -> (i32, i32) {
    %c0_i32 = arith.constant 0 : i32
    %c0_i32_0 = arith.constant 0 : i32
    %c0_i32_1 = arith.constant 0 : i32
    return %c0_i32, %c0_i32_0 : i32, i32
  }
  func.func @transform_5(%arg0: i32, %arg1: i32) -> (i32, i32, i32) {
    %c2_i32 = arith.constant 2 : i32
    %0 = arith.muli %arg0, %c2_i32 : i32
    %1 = arith.addi %0, %arg1 : i32
    %c0_i32 = arith.constant 0 : i32
    %c0_i32_0 = arith.constant 0 : i32
    %c0_i32_1 = arith.constant 0 : i32
    return %1, %c0_i32, %c0_i32_0 : i32, i32, i32
  }
}

</mosaic_0001>

<llo_original>
// kernel: tpu_custom_call.1
$region0: #{tpu_custom_call.1}
  #allocation0 [shape = 'u32[]', space=smem, size = 0x4, offset = 0x4, fixed_abs, tag = 'smem constant byte address 0x4 - core index']
  #allocation1 [shape = 'u32[72,128]{1,0:T(1,128)}', space=vmem, size = 0x9000, scoped, tag = 'internal scratch']
  %s0 = inlined_call_operand.vmem [shape: bf16[4,10,18,16], index: 0, kind: input, shape index: {}]
  %s1 = inlined_call_operand.vmem [shape: bf16[9,16,32], index: 1, kind: input, shape index: {}]
  %s2 = inlined_call_operand.vmem [shape: f32[1,32], index: 2, kind: input, shape index: {}]
  %s3 = inlined_call_operand.vmem [shape: bf16[32,119], index: 3, kind: input, shape index: {}]
  %s4 = inlined_call_operand.vmem [shape: f32[1,119], index: 4, kind: input, shape index: {}]
  %s5 = inlined_call_operand.hbm [shape: f32[4,128,128], index: 5, kind: output, shape index: {}]
  %s6 = sld [smem:[#allocation0]]
  $region53: #{tpu_custom_call.1} parent=0
    _
  %s8 = ssub.s32 1, %s6
  %s9 = scalar_select 0, %s8, %s6
  $region1: #{tpu_custom_call.1} parent=0
    #allocation2 [shape = 'u8[131072]{0}', space=vmem, size = 0x20000, scoped, tag = 'output window, operand 0']
    #allocation3 [shape = 's32[2]{0}', space=sflag, size = 0x8, scoped, tag = 'scoped memory for tpu_custom_call.1']
    %10 = vsyncpa [#allocation3], 0
    %s11 = scalar_lea.sflag [#allocation3], 1
    %12 = vsyncpa %s11, 0
    loop: start=0, step=1, limit=6
    $region2: #{tpu_custom_call.1} parent=1 // loop_pre_header
      _
    $region3: #{tpu_custom_call.1} parent=1 // loop_header
      %s14 = sphi 0, %s18
      %p15 = scmp.ge.s32.totalorder %s14, 6
      %s21 = sphi 0, %s33
      %s22 = sphi 0, %s29
      %s23 = sphi 0, %s21
      %s24 = sphi 0, %s22
      %s25 = sphi 0, %s23
      %s26 = sphi 0, %s24
      %s40 = sphi 0, %s42
      %s43 = sphi 0, %s40
      %s44 = sphi 0, %s43
      %s60 = sphi 0, %s44
      %s64 = sphi 0, %s64
      %s66 = sphi 0, %s64
      %s67 = sphi 0, %s66
      %s81 = sphi 0, %s67
      %s85 = sphi 0, %s85
      %s87 = sphi 0, %s85
      %s88 = sphi 0, %s87
      %s102 = sphi 0, %s88
      %s106 = sphi 0, %s106
      %s108 = sphi 0, %s106
      %s109 = sphi 0, %s108
      %s123 = sphi 0, %s109
      %s127 = sphi 0, %s127
      %s129 = sphi 0, %s127
      %s130 = sphi 0, %s129
      %s144 = sphi 0, %s130
      %s154 = sphi 0, %s156
      %s157 = sphi 0, %s154
      %s158 = sphi 0, %s157
      %s174 = sphi 0, %s158
    $region4: #{tpu_custom_call.1} parent=1 // loop_header_branch
      %17 = sbr.rel (%p15) target = $region8
    $region5: #{tpu_custom_call.1} parent=1 // loop_body
      %s19 = ssub.s32 %s14, 1
      %s20 = ssub.s32 %s14, 2
      %s27 = sadd.s32 1, %s22
      %p28 = scmp.ge.s32.totalorder %s27, 2
      %s29 = scalar_select %p28, 0, %s27
      %s30 = sadd.s32 1, %s21
      %s31 = scalar_select %p28, %s30, %s21
      %p32 = scmp.ge.s32.totalorder %s31, 2
      %s33 = scalar_select %p32, 0, %s31
      %s34 = smul.u32 %s21, 2
      %s35 = sadd.s32 %s34, %s22
      %s36 = smul.u32 %s33, 2
      %s37 = sadd.s32 %s36, %s29
      %s38 = ssub.s32 %s35, %s37
      %p39 = scmp.eq.s32.totalorder %s38, 0
      %s41 = sadd.s32 %s40, 1
      %s42 = scalar_select %p39, %s40, %s41
      %p45 = pneg %p39
      %p46 = scmp.eq.s32.totalorder %s14, 3
      %p47 = por %p45, %p46
      %p48 = scmp.ne.s32.totalorder %s40, %s43
      %p49 = scmp.eq.s32.totalorder %s14, 0
      %p50 = por %p48, %p49
      %p51 = scmp.ne.s32.totalorder %s40, %s43
      %p52 = scmp.eq.s32.totalorder %s19, 3
      %p53 = por %p51, %p52
      %p54 = scmp.ne.s32.totalorder %s43, %s44
      %p55 = scmp.eq.s32.totalorder %s19, 0
      %p56 = por %p54, %p55
      %p57 = scmp.ne.s32.totalorder %s43, %s44
      %p58 = scmp.eq.s32.totalorder %s20, 3
      %p59 = por %p57, %p58
      %p61 = scmp.ne.s32.totalorder %s44, %s60
      %p62 = scmp.eq.s32.totalorder %s20, 0
      %p63 = por %p61, %p62
      %s65 = sadd.s32 %s64, 1
      %p68 = scmp.eq.s32.totalorder %s14, 3
      %p69 = scmp.ne.s32.totalorder %s64, %s66
      %p70 = scmp.eq.s32.totalorder %s14, 0
      %p71 = por %p69, %p70
      %p72 = scmp.ne.s32.totalorder %s64, %s66
      %p73 = scmp.eq.s32.totalorder %s19, 3
      %p74 = por %p72, %p73
      %p75 = scmp.ne.s32.totalorder %s66, %s67
      %p76 = scmp.eq.s32.totalorder %s19, 0
      %p77 = por %p75, %p76
      %p78 = scmp.ne.s32.totalorder %s66, %s67
      %p79 = scmp.eq.s32.totalorder %s20, 3
      %p80 = por %p78, %p79
      %p82 = scmp.ne.s32.totalorder %s67, %s81
      %p83 = scmp.eq.s32.totalorder %s20, 0
      %p84 = por %p82, %p83
      %s86 = sadd.s32 %s85, 1
      %p89 = scmp.eq.s32.totalorder %s14, 3
      %p90 = scmp.ne.s32.totalorder %s85, %s87
      %p91 = scmp.eq.s32.totalorder %s14, 0
      %p92 = por %p90, %p91
      %p93 = scmp.ne.s32.totalorder %s85, %s87
      %p94 = scmp.eq.s32.totalorder %s19, 3
      %p95 = por %p93, %p94
      %p96 = scmp.ne.s32.totalorder %s87, %s88
      %p97 = scmp.eq.s32.totalorder %s19, 0
      %p98 = por %p96, %p97
      %p99 = scmp.ne.s32.totalorder %s87, %s88
      %p100 = scmp.eq.s32.totalorder %s20, 3
      %p101 = por %p99, %p100
      %p103 = scmp.ne.s32.totalorder %s88, %s102
      %p104 = scmp.eq.s32.totalorder %s20, 0
      %p105 = por %p103, %p104
      %s107 = sadd.s32 %s106, 1
      %p110 = scmp.eq.s32.totalorder %s14, 3
      %p111 = scmp.ne.s32.totalorder %s106, %s108
      %p112 = scmp.eq.s32.totalorder %s14, 0
      %p113 = por %p111, %p112
      %p114 = scmp.ne.s32.totalorder %s106, %s108
      %p115 = scmp.eq.s32.totalorder %s19, 3
      %p116 = por %p114, %p115
      %p117 = scmp.ne.s32.totalorder %s108, %s109
      %p118 = scmp.eq.s32.totalorder %s19, 0
      %p119 = por %p117, %p118
      %p120 = scmp.ne.s32.totalorder %s108, %s109
      %p121 = scmp.eq.s32.totalorder %s20, 3
      %p122 = por %p120, %p121
      %p124 = scmp.ne.s32.totalorder %s109, %s123
      %p125 = scmp.eq.s32.totalorder %s20, 0
      %p126 = por %p124, %p125
      %s128 = sadd.s32 %s127, 1
      %p131 = scmp.eq.s32.totalorder %s14, 3
      %p132 = scmp.ne.s32.totalorder %s127, %s129
      %p133 = scmp.eq.s32.totalorder %s14, 0
      %p134 = por %p132, %p133
      %p135 = scmp.ne.s32.totalorder %s127, %s129
      %p136 = scmp.eq.s32.totalorder %s19, 3
      %p137 = por %p135, %p136
      %p138 = scmp.ne.s32.totalorder %s129, %s130
      %p139 = scmp.eq.s32.totalorder %s19, 0
      %p140 = por %p138, %p139
      %p141 = scmp.ne.s32.totalorder %s129, %s130
      %p142 = scmp.eq.s32.totalorder %s20, 3
      %p143 = por %p141, %p142
      %p145 = scmp.ne.s32.totalorder %s130, %s144
      %p146 = scmp.eq.s32.totalorder %s20, 0
      %p147 = por %p145, %p146
      %s148 = smul.u32 %s21, 2
      %s149 = sadd.s32 %s148, %s22
      %s150 = smul.u32 %s33, 2
      %s151 = sadd.s32 %s150, %s29
      %s152 = ssub.s32 %s149, %s151
      %p153 = scmp.eq.s32.totalorder %s152, 0
      %s155 = sadd.s32 %s154, 1
      %s156 = scalar_select %p153, %s154, %s155
      %p159 = pneg %p153
      %p160 = scmp.eq.s32.totalorder %s14, 3
      %p161 = por %p159, %p160
      %p162 = scmp.ne.s32.totalorder %s154, %s157
      %p163 = scmp.eq.s32.totalorder %s14, 0
      %p164 = por %p162, %p163
      %p165 = scmp.ne.s32.totalorder %s154, %s157
      %p166 = scmp.eq.s32.totalorder %s19, 3
      %p167 = por %p165, %p166
      %p168 = scmp.ne.s32.totalorder %s157, %s158
      %p169 = scmp.eq.s32.totalorder %s19, 0
      %p170 = por %p168, %p169
      %p171 = scmp.ne.s32.totalorder %s157, %s158
      %p172 = scmp.eq.s32.totalorder %s20, 3
      %p173 = por %p171, %p172
      %p175 = scmp.ne.s32.totalorder %s158, %s174
      %p176 = scmp.eq.s32.totalorder %s20, 0
      %p177 = por %p175, %p176
      %p178 = scmp.le.s32.totalorder 1, %s14
      %p179 = scmp.lt.s32.totalorder %s14, 5
      %p180 = pnand %p178, %p179
      %p181 = pneg %p180
      // Predicated region
      $region9: #{tpu_custom_call.1} parent=5 // pred_check
        _
      $region10: #{tpu_custom_call.1} parent=5 // pred_check_branch
        %183 = sbr.rel (%p180) target = $region12
      $region11: #{tpu_custom_call.1} parent=5 // pred_region
        %s184 = ssub.s32 %s14, 1
        // Predicated region
        $region13: #{tpu_custom_call.1} parent=11 // pred_check
          %p185 = pneg %p77
        $region14: #{tpu_custom_call.1} parent=11 // pred_check_branch
          %187 = sbr.rel (%p185) target = $region16
        $region15: #{tpu_custom_call.1} parent=11 // pred_region
          _
        $region16: #{tpu_custom_call.1} parent=11 // pred_fallthru
          _
        // Predicated region
        $region17: #{tpu_custom_call.1} parent=11 // pred_check
          %p188 = pneg %p98
        $region18: #{tpu_custom_call.1} parent=11 // pred_check_branch
          %190 = sbr.rel (%p188) target = $region20
        $region19: #{tpu_custom_call.1} parent=11 // pred_region
          _
        $region20: #{tpu_custom_call.1} parent=11 // pred_fallthru
          _
        // Predicated region
        $region21: #{tpu_custom_call.1} parent=11 // pred_check
          %p191 = pneg %p119
        $region22: #{tpu_custom_call.1} parent=11 // pred_check_branch
          %193 = sbr.rel (%p191) target = $region24
        $region23: #{tpu_custom_call.1} parent=11 // pred_region
          _
        $region24: #{tpu_custom_call.1} parent=11 // pred_fallthru
          _
        // Predicated region
        $region25: #{tpu_custom_call.1} parent=11 // pred_check
          %p194 = pneg %p140
        $region26: #{tpu_custom_call.1} parent=11 // pred_check_branch
          %196 = sbr.rel (%p194) target = $region28
        $region27: #{tpu_custom_call.1} parent=11 // pred_region
          _
        $region28: #{tpu_custom_call.1} parent=11 // pred_fallthru
          _
      $region12: #{tpu_custom_call.1} parent=5 // pred_fallthru
        _
      %p197 = scmp.lt.s32.totalorder %s14, 4
      // Predicated region
      $region29: #{tpu_custom_call.1} parent=5 // pred_check
        %p198 = pneg %p197
      $region30: #{tpu_custom_call.1} parent=5 // pred_check_branch
        %200 = sbr.rel (%p198) target = $region32
      $region31: #{tpu_custom_call.1} parent=5 // pred_region
        // Predicated region
        $region33: #{tpu_custom_call.1} parent=31 // pred_check
          %p201 = pneg %p50
        $region34: #{tpu_custom_call.1} parent=31 // pred_check_branch
          %203 = sbr.rel (%p201) target = $region36
        $region35: #{tpu_custom_call.1} parent=31 // pred_region
          %s204 = smul.u32 %s21, 2
          %s205 = sadd.s32 %s204, %s22
          %p206 = scmp.lt.s32.totalorder %s205, 3
          %s207 = scalar_select %p206, %s205, 3
          %s208 = smul.addr %s207, 30
          %s209 = smul.addr %s208, 4
          %s210 = scalar_lea.vmem %s0, %s209
          %s211 = smul.u32 %s21, 2
          %s212 = sadd.s32 %s211, %s22
        $region36: #{tpu_custom_call.1} parent=31 // pred_fallthru
          _
      $region32: #{tpu_custom_call.1} parent=5 // pred_fallthru
        _
      %p213 = scmp.le.s32.totalorder 1, %s14
      %p214 = scmp.lt.s32.totalorder %s14, 5
      %p215 = pnand %p213, %p214
      %p216 = pneg %p215
      // Predicated region
      $region37: #{tpu_custom_call.1} parent=5 // pred_check
        _
      $region38: #{tpu_custom_call.1} parent=5 // pred_check_branch
        %218 = sbr.rel (%p215) target = $region40
      $region39: #{tpu_custom_call.1} parent=5 // pred_region
        %s219 = ssub.s32 %s14, 1
        %s220 = smul.u32 %s23, 2
        %s221 = sadd.s32 %s220, %s24
        %p222 = scmp.lt.s32.totalorder %s221, 3
        %s223 = scalar_select %p222, %s221, 3
        %s224 = smul.addr %s223, 30
        %s225 = smul.addr %s224, 4
        %s226 = scalar_lea.vmem %s0, %s225
        %p227 = pneg %p56
        %p228 = pneg %p53
        %p229 = pneg %p77
        %p230 = pneg %p74
        %p231 = pneg %p98
        %p232 = pneg %p95
        %p233 = pneg %p119
        %p234 = pneg %p116
        %p235 = pneg %p140
        %p236 = pneg %p137
        %p237 = pneg %p170
        %p238 = pneg %p167
        %s239 = sand.u32 %s157, 1
        %s240 = scalar_lea.sflag [#allocation3], %s239
        %s241 = sand.u32 %s157, 1
        %s242 = smul.addr %s241, 128
        %s243 = scalar_lea.vmem [#allocation2], %s242
        %s244 = smul.u32 %s23, 2
        %s245 = sadd.s32 %s244, %s24
        %p246 = scmp.lt.s32.totalorder %s245, 3
        %s247 = scalar_select %p246, %s245, 3
        %s248 = smul.addr %s247, 30
        %s249 = smul.addr %s248, 4
        %s250 = scalar_lea.vmem %s0, %s249
        %s251 = smul.u32 %s23, 2
        %s252 = sadd.s32 %s251, %s24
        %s253 = smul.u32 %s23, 2
        %s254 = sadd.s32 %s253, %s24
        %v256 = vld [vmem:[%s250] sm:$0xf]
        %v257 = vld [vmem:[%s250 + $0x4] sm:$0xf]
        %v258 = vld [vmem:[%s250 + $0xc] sm:$0xf]
        %v259 = vld [vmem:[%s250 + $0x10] sm:$0xf]
        %v260 = vld [vmem:[%s250 + $0x18] sm:$0xf]
        %v261 = vld [vmem:[%s250 + $0x1c] sm:$0xf]
        %v262 = vld [vmem:[%s250 + $0x24] sm:$0xf]
        %v263 = vld [vmem:[%s250 + $0x28] sm:$0xf]
        %v264 = vld [vmem:[%s250 + $0x30] sm:$0xf]
        %v265 = vld [vmem:[%s250 + $0x34] sm:$0xf]
        %v266 = vld [vmem:[%s250 + $0x3c] sm:$0xf]
        %v267 = vld [vmem:[%s250 + $0x40] sm:$0xf]
        %v268 = vld [vmem:[%s250 + $0x48] sm:$0xf]
        %v269 = vld [vmem:[%s250 + $0x4c] sm:$0xf]
        %v270 = vld [vmem:[%s250 + $0x54] sm:$0xf]
        %v271 = vld [vmem:[%s250 + $0x58] sm:$0xf]
        %v272 = vld [vmem:[%s1] sm:$0xf]
        %v273 = vld [vmem:[%s1 + $0x4] sm:$0xf]
        %v274 = vld [vmem:[%s250 + $0x8] sm:$0x1]
        %v275 = vld [vmem:[%s250 + $0x14] sm:$0x1]
        %v276 = vld [vmem:[%s250 + $0x20] sm:$0x1]
        %v277 = vld [vmem:[%s250 + $0x2c] sm:$0x1]
        %v278 = vld [vmem:[%s250 + $0x38] sm:$0x1]
        %v279 = vld [vmem:[%s250 + $0x44] sm:$0x1]
        %v280 = vld [vmem:[%s250 + $0x50] sm:$0x1]
        %v281 = vld [vmem:[%s250 + $0x5c] sm:$0x1]
        %vm282 = vsmask.f32 3328
        %vm283 = vsmask.f32 7440
        %vm284 = vmor %vm282, %vm283
        %v286 = vshrl.u32 %v256, 16
        %v288 = vrot.slane %v286, 4
        %v289 = vshll.u32 %v256, 16
        %v291 = vrot.slane %v289, 5
        %v292 = vor.u32 %v288, %v291
        %v293 = vrot.slane %v292, 4
        %v295 = vshll.u32 %v257, 16
        %v297 = vrot.slane %v295, 5
        %v298 = vsel %vm284, %v293, %v297
        %v299 = vshrl.u32 %v257, 16
        %v301 = vrot.slane %v299, 4
        %v302 = vor.u32 %v301, %v297
        %v303 = vrot.slane %v302, 4
        %v305 = vshll.u32 %v274, 16
        %v307 = vrot.slane %v305, 5
        %v308 = vsel %vm284, %v303, %v307
        %v310 = vshrl.u32 %v258, 16
        %v312 = vrot.slane %v310, 4
        %v313 = vshll.u32 %v258, 16
        %v315 = vrot.slane %v313, 5
        %v316 = vor.u32 %v312, %v315
        %v317 = vrot.slane %v316, 4
        %v319 = vshll.u32 %v259, 16
        %v321 = vrot.slane %v319, 5
        %v322 = vsel %vm284, %v317, %v321
        %v323 = vshrl.u32 %v259, 16
        %v325 = vrot.slane %v323, 4
        %v326 = vor.u32 %v325, %v321
        %v327 = vrot.slane %v326, 4
        %v329 = vshll.u32 %v275, 16
        %v331 = vrot.slane %v329, 5
        %v332 = vsel %vm284, %v327, %v331
        %v334 = vshrl.u32 %v260, 16
        %v336 = vrot.slane %v334, 4
        %v337 = vshll.u32 %v260, 16
        %v339 = vrot.slane %v337, 5
        %v340 = vor.u32 %v336, %v339
        %v341 = vrot.slane %v340, 4
        %v343 = vshll.u32 %v261, 16
        %v345 = vrot.slane %v343, 5
        %v346 = vsel %vm284, %v341, %v345
        %v347 = vshrl.u32 %v261, 16
        %v349 = vrot.slane %v347, 4
        %v350 = vor.u32 %v349, %v345
        %v351 = vrot.slane %v350, 4
        %v353 = vshll.u32 %v276, 16
        %v355 = vrot.slane %v353, 5
        %v356 = vsel %vm284, %v351, %v355
        %v358 = vshrl.u32 %v262, 16
        %v360 = vrot.slane %v358, 4
        %v361 = vshll.u32 %v262, 16
        %v363 = vrot.slane %v361, 5
        %v364 = vor.u32 %v360, %v363
        %v365 = vrot.slane %v364, 4
        %v367 = vshll.u32 %v263, 16
        %v369 = vrot.slane %v367, 5
        %v370 = vsel %vm284, %v365, %v369
        %v371 = vshrl.u32 %v263, 16
        %v373 = vrot.slane %v371, 4
        %v374 = vor.u32 %v373, %v369
        %v375 = vrot.slane %v374, 4
        %v377 = vshll.u32 %v277, 16
        %v379 = vrot.slane %v377, 5
        %v380 = vsel %vm284, %v375, %v379
        %v382 = vshrl.u32 %v264, 16
        %v384 = vrot.slane %v382, 4
        %v385 = vshll.u32 %v264, 16
        %v387 = vrot.slane %v385, 5
        %v388 = vor.u32 %v384, %v387
        %v389 = vrot.slane %v388, 4
        %v391 = vshll.u32 %v265, 16
        %v393 = vrot.slane %v391, 5
        %v394 = vsel %vm284, %v389, %v393
        %v395 = vshrl.u32 %v265, 16
        %v397 = vrot.slane %v395, 4
        %v398 = vor.u32 %v397, %v393
        %v399 = vrot.slane %v398, 4
        %v401 = vshll.u32 %v278, 16
        %v403 = vrot.slane %v401, 5
        %v404 = vsel %vm284, %v399, %v403
        %v406 = vshrl.u32 %v266, 16
        %v408 = vrot.slane %v406, 4
        %v409 = vshll.u32 %v266, 16
        %v411 = vrot.slane %v409, 5
        %v412 = vor.u32 %v408, %v411
        %v413 = vrot.slane %v412, 4
        %v415 = vshll.u32 %v267, 16
        %v417 = vrot.slane %v415, 5
        %v418 = vsel %vm284, %v413, %v417
        %v419 = vshrl.u32 %v267, 16
        %v421 = vrot.slane %v419, 4
        %v422 = vor.u32 %v421, %v417
        %v423 = vrot.slane %v422, 4
        %v425 = vshll.u32 %v279, 16
        %v427 = vrot.slane %v425, 5
        %v428 = vsel %vm284, %v423, %v427
        %v430 = vshrl.u32 %v268, 16
        %v432 = vrot.slane %v430, 4
        %v433 = vshll.u32 %v268, 16
        %v435 = vrot.slane %v433, 5
        %v436 = vor.u32 %v432, %v435
        %v437 = vrot.slane %v436, 4
        %v439 = vshll.u32 %v269, 16
        %v441 = vrot.slane %v439, 5
        %v442 = vsel %vm284, %v437, %v441
        %v443 = vshrl.u32 %v269, 16
        %v445 = vrot.slane %v443, 4
        %v446 = vor.u32 %v445, %v441
        %v447 = vrot.slane %v446, 4
        %v449 = vshll.u32 %v280, 16
        %v451 = vrot.slane %v449, 5
        %v452 = vsel %vm284, %v447, %v451
        %v454 = vshrl.u32 %v270, 16
        %v456 = vrot.slane %v454, 4
        %v457 = vshll.u32 %v270, 16
        %v459 = vrot.slane %v457, 5
        %v460 = vor.u32 %v456, %v459
        %v461 = vrot.slane %v460, 4
        %v463 = vshll.u32 %v271, 16
        %v465 = vrot.slane %v463, 5
        %v466 = vsel %vm284, %v461, %v465
        %v467 = vshrl.u32 %v271, 16
        %v469 = vrot.slane %v467, 4
        %v470 = vor.u32 %v469, %v465
        %v471 = vrot.slane %v470, 4
        %v473 = vshll.u32 %v281, 16
        %v475 = vrot.slane %v473, 5
        %v476 = vsel %vm284, %v471, %v475
        %s477 = scalar_lea.vmem %s1, 8
        %v478 = vld [vmem:[%s477] sm:$0xf]
        %v479 = vld [vmem:[%s477 + $0x4] sm:$0xf]
        %v480 = vunpack.c.l.b16 %v298
        %v481 = vunpack.c.l.b16 %v308
        %v482 = vunpack.c.l.b16 %v322
        %v483 = vunpack.c.l.b16 %v332
        %v484 = vunpack.c.l.b16 %v346
        %v485 = vunpack.c.l.b16 %v356
        %v486 = vunpack.c.l.b16 %v370
        %v487 = vunpack.c.l.b16 %v380
        %v488 = vunpack.c.l.b16 %v394
        %v489 = vunpack.c.l.b16 %v404
        %v490 = vunpack.c.l.b16 %v418
        %v491 = vunpack.c.l.b16 %v428
        %v492 = vunpack.c.l.b16 %v442
        %v493 = vunpack.c.l.b16 %v452
        %v494 = vunpack.c.l.b16 %v466
        %v495 = vunpack.c.l.b16 %v476
        %v496 = vpack.c.b16 %v481, %v480
        %v497 = vpack.c.b16 %v483, %v482
        %v498 = vpack.c.b16 %v485, %v484
        %v499 = vpack.c.b16 %v487, %v486
        %v500 = vpack.c.b16 %v489, %v488
        %v501 = vpack.c.b16 %v491, %v490
        %v502 = vpack.c.b16 %v493, %v492
        %v503 = vpack.c.b16 %v495, %v494
        %v506 = vunpack.c.l.b16 %v478
        %v507 = vunpack.c.l.b16 %v479
        %v508 = vpack.c.b16 %v507, %v506
        %vm510 = vcmask 130048
        %v512 = vsel %vm510, %v496, 0
        %v515 = vsel %vm510, %v497, 0
        %v518 = vsel %vm510, %v498, 0
        %v521 = vsel %vm510, %v499, 0
        %v524 = vsel %vm510, %v500, 0
        %v527 = vsel %vm510, %v501, 0
        %v530 = vsel %vm510, %v502, 0
        %v533 = vsel %vm510, %v503, 0
        %535 = vmatpush.bf16.msra.mxu0 0
        %536 = vmatpush.bf16.msra.mxu0 0
        %537 = vmatpush.bf16.msra.mxu0 0
        %538 = vmatpush.bf16.msra.mxu0 0
        %539 = vmatpush.bf16.msra.mxu0 0
        %540 = vmatpush.bf16.msra.mxu0 0
        %541 = vmatpush.bf16.msra.mxu0 0
        %542 = vmatpush.bf16.msra.mxu0 %v508
        %543 = vmatmul.bf16.gmra.mxu0 %v512
        %v544 = vpop.f32.mrf.mxu0
        %v545 = vadd.f32 0.0, %v544
        %v546 = vpop.f32.mrf.mxu0
        %v547 = vadd.f32 0.0, %v546
        %548 = vmatmul.bf16.gmra.mxu0 %v515
        %v549 = vpop.f32.mrf.mxu0
        %v550 = vadd.f32 0.0, %v549
        %v551 = vpop.f32.mrf.mxu0
        %v552 = vadd.f32 0.0, %v551
        %553 = vmatmul.bf16.gmra.mxu0 %v518
        %v554 = vpop.f32.mrf.mxu0
        %v555 = vadd.f32 0.0, %v554
        %v556 = vpop.f32.mrf.mxu0
        %v557 = vadd.f32 0.0, %v556
        %558 = vmatmul.bf16.gmra.mxu0 %v521
        %v559 = vpop.f32.mrf.mxu0
        %v560 = vadd.f32 0.0, %v559
        %v561 = vpop.f32.mrf.mxu0
        %v562 = vadd.f32 0.0, %v561
        %563 = vmatmul.bf16.gmra.mxu0 %v524
        %v564 = vpop.f32.mrf.mxu0
        %v565 = vadd.f32 0.0, %v564
        %v566 = vpop.f32.mrf.mxu0
        %v567 = vadd.f32 0.0, %v566
        %568 = vmatmul.bf16.gmra.mxu0 %v527
        %v569 = vpop.f32.mrf.mxu0
        %v570 = vadd.f32 0.0, %v569
        %v571 = vpop.f32.mrf.mxu0
        %v572 = vadd.f32 0.0, %v571
        %573 = vmatmul.bf16.gmra.mxu0 %v530
        %v574 = vpop.f32.mrf.mxu0
        %v575 = vadd.f32 0.0, %v574
        %v576 = vpop.f32.mrf.mxu0
        %v577 = vadd.f32 0.0, %v576
        %578 = vmatmul.bf16.gmra.mxu0 %v533
        %v579 = vpop.f32.mrf.mxu0
        %v580 = vadd.f32 0.0, %v579
        %v581 = vpop.f32.mrf.mxu0
        %v582 = vadd.f32 0.0, %v581
        %583 = vdwg.mxu0
        %v600 = vunpack.c.l.b16 %v256
        %v601 = vunpack.c.l.b16 %v257
        %v602 = vunpack.c.l.b16 %v258
        %v603 = vunpack.c.l.b16 %v259
        %v604 = vunpack.c.l.b16 %v260
        %v605 = vunpack.c.l.b16 %v261
        %v606 = vunpack.c.l.b16 %v262
        %v607 = vunpack.c.l.b16 %v263
        %v608 = vunpack.c.l.b16 %v264
        %v609 = vunpack.c.l.b16 %v265
        %v610 = vunpack.c.l.b16 %v266
        %v611 = vunpack.c.l.b16 %v267
        %v612 = vunpack.c.l.b16 %v268
        %v613 = vunpack.c.l.b16 %v269
        %v614 = vunpack.c.l.b16 %v270
        %v615 = vunpack.c.l.b16 %v271
        %v616 = vpack.c.b16 %v601, %v600
        %v617 = vpack.c.b16 %v603, %v602
        %v618 = vpack.c.b16 %v605, %v604
        %v619 = vpack.c.b16 %v607, %v606
        %v620 = vpack.c.b16 %v609, %v608
        %v621 = vpack.c.b16 %v611, %v610
        %v622 = vpack.c.b16 %v613, %v612
        %v623 = vpack.c.b16 %v615, %v614
        %v626 = vunpack.c.l.b16 %v272
        %v627 = vunpack.c.l.b16 %v273
        %v628 = vpack.c.b16 %v627, %v626
        %v631 = vsel %vm510, %v616, 0
        %v634 = vsel %vm510, %v617, 0
        %v637 = vsel %vm510, %v618, 0
        %v640 = vsel %vm510, %v619, 0
        %v643 = vsel %vm510, %v620, 0
        %v646 = vsel %vm510, %v621, 0
        %v649 = vsel %vm510, %v622, 0
        %v652 = vsel %vm510, %v623, 0
        %654 = vmatpush.bf16.msra.mxu0 0
        %655 = vmatpush.bf16.msra.mxu0 0
        %656 = vmatpush.bf16.msra.mxu0 0
        %657 = vmatpush.bf16.msra.mxu0 0
        %658 = vmatpush.bf16.msra.mxu0 0
        %659 = vmatpush.bf16.msra.mxu0 0
        %660 = vmatpush.bf16.msra.mxu0 0
        %661 = vmatpush.bf16.msra.mxu0 %v628
        %662 = vmatmul.bf16.gmra.mxu0 %v631
        %v663 = vpop.f32.mrf.mxu0
        %v664 = vadd.f32 %v545, %v663
        %v665 = vpop.f32.mrf.mxu0
        %v666 = vadd.f32 %v547, %v665
        %667 = vmatmul.bf16.gmra.mxu0 %v634
        %v668 = vpop.f32.mrf.mxu0
        %v669 = vadd.f32 %v550, %v668
        %v670 = vpop.f32.mrf.mxu0
        %v671 = vadd.f32 %v552, %v670
        %672 = vmatmul.bf16.gmra.mxu0 %v637
        %v673 = vpop.f32.mrf.mxu0
        %v674 = vadd.f32 %v555, %v673
        %v675 = vpop.f32.mrf.mxu0
        %v676 = vadd.f32 %v557, %v675
        %677 = vmatmul.bf16.gmra.mxu0 %v640
        %v678 = vpop.f32.mrf.mxu0
        %v679 = vadd.f32 %v560, %v678
        %v680 = vpop.f32.mrf.mxu0
        %v681 = vadd.f32 %v562, %v680
        %682 = vmatmul.bf16.gmra.mxu0 %v643
        %v683 = vpop.f32.mrf.mxu0
        %v684 = vadd.f32 %v565, %v683
        %v685 = vpop.f32.mrf.mxu0
        %v686 = vadd.f32 %v567, %v685
        %687 = vmatmul.bf16.gmra.mxu0 %v646
        %v688 = vpop.f32.mrf.mxu0
        %v689 = vadd.f32 %v570, %v688
        %v690 = vpop.f32.mrf.mxu0
        %v691 = vadd.f32 %v572, %v690
        %692 = vmatmul.bf16.gmra.mxu0 %v649
        %v693 = vpop.f32.mrf.mxu0
        %v694 = vadd.f32 %v575, %v693
        %v695 = vpop.f32.mrf.mxu0
        %v696 = vadd.f32 %v577, %v695
        %697 = vmatmul.bf16.gmra.mxu0 %v652
        %v698 = vpop.f32.mrf.mxu0
        %v699 = vadd.f32 %v580, %v698
        %v700 = vpop.f32.mrf.mxu0
        %v701 = vadd.f32 %v582, %v700
        %702 = vdwg.mxu0
        %v703 = vld [vmem:[%s250] sm:$0xe]
        %v704 = vld [vmem:[%s250 + $0xc] sm:$0xe]
        %v705 = vld [vmem:[%s250 + $0x18] sm:$0xe]
        %v706 = vld [vmem:[%s250 + $0x24] sm:$0xe]
        %v707 = vld [vmem:[%s250 + $0x30] sm:$0xe]
        %v708 = vld [vmem:[%s250 + $0x3c] sm:$0xe]
        %v709 = vld [vmem:[%s250 + $0x48] sm:$0xe]
        %v710 = vld [vmem:[%s250 + $0x54] sm:$0xe]
        %vm727 = vcmask 1042432
        %vm728 = vcmask 1046532
        %vm729 = vmor %vm727, %vm728
        %v730 = vrot.slane %v703, 5
        %v731 = vrot.slane %v730, 4
        %v732 = vrot.slane %v257, 5
        %v733 = vsel %vm729, %v731, %v732
        %v734 = vrot.slane %v732, 4
        %v735 = vrot.slane %v274, 5
        %v736 = vsel %vm729, %v734, %v735
        %v737 = vrot.slane %v704, 5
        %v738 = vrot.slane %v737, 4
        %v739 = vrot.slane %v259, 5
        %v740 = vsel %vm729, %v738, %v739
        %v741 = vrot.slane %v739, 4
        %v742 = vrot.slane %v275, 5
        %v743 = vsel %vm729, %v741, %v742
        %v744 = vrot.slane %v705, 5
        %v745 = vrot.slane %v744, 4
        %v746 = vrot.slane %v261, 5
        %v747 = vsel %vm729, %v745, %v746
        %v748 = vrot.slane %v746, 4
        %v749 = vrot.slane %v276, 5
        %v750 = vsel %vm729, %v748, %v749
        %v751 = vrot.slane %v706, 5
        %v752 = vrot.slane %v751, 4
        %v753 = vrot.slane %v263, 5
        %v754 = vsel %vm729, %v752, %v753
        %v755 = vrot.slane %v753, 4
        %v756 = vrot.slane %v277, 5
        %v757 = vsel %vm729, %v755, %v756
        %v758 = vrot.slane %v707, 5
        %v759 = vrot.slane %v758, 4
        %v760 = vrot.slane %v265, 5
        %v761 = vsel %vm729, %v759, %v760
        %v762 = vrot.slane %v760, 4
        %v763 = vrot.slane %v278, 5
        %v764 = vsel %vm729, %v762, %v763
        %v765 = vrot.slane %v708, 5
        %v766 = vrot.slane %v765, 4
        %v767 = vrot.slane %v267, 5
        %v768 = vsel %vm729, %v766, %v767
        %v769 = vrot.slane %v767, 4
        %v770 = vrot.slane %v279, 5
        %v771 = vsel %vm729, %v769, %v770
        %v772 = vrot.slane %v709, 5
        %v773 = vrot.slane %v772, 4
        %v774 = vrot.slane %v269, 5
        %v775 = vsel %vm729, %v773, %v774
        %v776 = vrot.slane %v774, 4
        %v777 = vrot.slane %v280, 5
        %v778 = vsel %vm729, %v776, %v777
        %v779 = vrot.slane %v710, 5
        %v780 = vrot.slane %v779, 4
        %v781 = vrot.slane %v271, 5
        %v782 = vsel %vm729, %v780, %v781
        %v783 = vrot.slane %v781, 4
        %v784 = vrot.slane %v281, 5
        %v785 = vsel %vm729, %v783, %v784
        %s786 = scalar_lea.vmem %s1, 16
        %v787 = vld [vmem:[%s786] sm:$0xf]
        %v788 = vld [vmem:[%s786 + $0x4] sm:$0xf]
        %v789 = vunpack.c.l.b16 %v733
        %v790 = vunpack.c.l.b16 %v736
        %v791 = vunpack.c.l.b16 %v740
        %v792 = vunpack.c.l.b16 %v743
        %v793 = vunpack.c.l.b16 %v747
        %v794 = vunpack.c.l.b16 %v750
        %v795 = vunpack.c.l.b16 %v754
        %v796 = vunpack.c.l.b16 %v757
        %v797 = vunpack.c.l.b16 %v761
        %v798 = vunpack.c.l.b16 %v764
        %v799 = vunpack.c.l.b16 %v768
        %v800 = vunpack.c.l.b16 %v771
        %v801 = vunpack.c.l.b16 %v775
        %v802 = vunpack.c.l.b16 %v778
        %v803 = vunpack.c.l.b16 %v782
        %v804 = vunpack.c.l.b16 %v785
        %v805 = vpack.c.b16 %v790, %v789
        %v806 = vpack.c.b16 %v792, %v791
        %v807 = vpack.c.b16 %v794, %v793
        %v808 = vpack.c.b16 %v796, %v795
        %v809 = vpack.c.b16 %v798, %v797
        %v810 = vpack.c.b16 %v800, %v799
        %v811 = vpack.c.b16 %v802, %v801
        %v812 = vpack.c.b16 %v804, %v803
        %v815 = vunpack.c.l.b16 %v787
        %v816 = vunpack.c.l.b16 %v788
        %v817 = vpack.c.b16 %v816, %v815
        %v820 = vsel %vm510, %v805, 0
        %v823 = vsel %vm510, %v806, 0
        %v826 = vsel %vm510, %v807, 0
        %v829 = vsel %vm510, %v808, 0
        %v832 = vsel %vm510, %v809, 0
        %v835 = vsel %vm510, %v810, 0
        %v838 = vsel %vm510, %v811, 0
        %v841 = vsel %vm510, %v812, 0
        %843 = vmatpush.bf16.msra.mxu0 0
        %844 = vmatpush.bf16.msra.mxu0 0
        %845 = vmatpush.bf16.msra.mxu0 0
        %846 = vmatpush.bf16.msra.mxu0 0
        %847 = vmatpush.bf16.msra.mxu0 0
        %848 = vmatpush.bf16.msra.mxu0 0
        %849 = vmatpush.bf16.msra.mxu0 0
        %850 = vmatpush.bf16.msra.mxu0 %v817
        %851 = vmatmul.bf16.gmra.mxu0 %v820
        %v852 = vpop.f32.mrf.mxu0
        %v853 = vadd.f32 0.0, %v852
        %v854 = vpop.f32.mrf.mxu0
        %v855 = vadd.f32 0.0, %v854
        %856 = vmatmul.bf16.gmra.mxu0 %v823
        %v857 = vpop.f32.mrf.mxu0
        %v858 = vadd.f32 0.0, %v857
        %v859 = vpop.f32.mrf.mxu0
        %v860 = vadd.f32 0.0, %v859
        %861 = vmatmul.bf16.gmra.mxu0 %v826
        %v862 = vpop.f32.mrf.mxu0
        %v863 = vadd.f32 0.0, %v862
        %v864 = vpop.f32.mrf.mxu0
        %v865 = vadd.f32 0.0, %v864
        %866 = vmatmul.bf16.gmra.mxu0 %v829
        %v867 = vpop.f32.mrf.mxu0
        %v868 = vadd.f32 0.0, %v867
        %v869 = vpop.f32.mrf.mxu0
        %v870 = vadd.f32 0.0, %v869
        %871 = vmatmul.bf16.gmra.mxu0 %v832
        %v872 = vpop.f32.mrf.mxu0
        %v873 = vadd.f32 0.0, %v872
        %v874 = vpop.f32.mrf.mxu0
        %v875 = vadd.f32 0.0, %v874
        %876 = vmatmul.bf16.gmra.mxu0 %v835
        %v877 = vpop.f32.mrf.mxu0
        %v878 = vadd.f32 0.0, %v877
        %v879 = vpop.f32.mrf.mxu0
        %v880 = vadd.f32 0.0, %v879
        %881 = vmatmul.bf16.gmra.mxu0 %v838
        %v882 = vpop.f32.mrf.mxu0
        %v883 = vadd.f32 0.0, %v882
        %v884 = vpop.f32.mrf.mxu0
        %v885 = vadd.f32 0.0, %v884
        %886 = vmatmul.bf16.gmra.mxu0 %v841
        %v887 = vpop.f32.mrf.mxu0
        %v888 = vadd.f32 0.0, %v887
        %v889 = vpop.f32.mrf.mxu0
        %v890 = vadd.f32 0.0, %v889
        %891 = vdwg.mxu0
        %v892 = vadd.f32 %v664, %v853
        %v893 = vadd.f32 %v666, %v855
        %v894 = vadd.f32 %v669, %v858
        %v895 = vadd.f32 %v671, %v860
        %v896 = vadd.f32 %v674, %v863
        %v897 = vadd.f32 %v676, %v865
        %v898 = vadd.f32 %v679, %v868
        %v899 = vadd.f32 %v681, %v870
        %v900 = vadd.f32 %v684, %v873
        %v901 = vadd.f32 %v686, %v875
        %v902 = vadd.f32 %v689, %v878
        %v903 = vadd.f32 %v691, %v880
        %v904 = vadd.f32 %v694, %v883
        %v905 = vadd.f32 %v696, %v885
        %v906 = vadd.f32 %v699, %v888
        %v907 = vadd.f32 %v701, %v890
        %s908 = scalar_lea.vmem %s250, 12
        %v909 = vld [vmem:[%s908] sm:$0xf]
        %v910 = vld [vmem:[%s908 + $0x4] sm:$0xf]
        %v911 = vld [vmem:[%s908 + $0xc] sm:$0xf]
        %v912 = vld [vmem:[%s908 + $0x10] sm:$0xf]
        %v913 = vld [vmem:[%s908 + $0x18] sm:$0xf]
        %v914 = vld [vmem:[%s908 + $0x1c] sm:$0xf]
        %v915 = vld [vmem:[%s908 + $0x24] sm:$0xf]
        %v916 = vld [vmem:[%s908 + $0x28] sm:$0xf]
        %v917 = vld [vmem:[%s908 + $0x30] sm:$0xf]
        %v918 = vld [vmem:[%s908 + $0x34] sm:$0xf]
        %v919 = vld [vmem:[%s908 + $0x3c] sm:$0xf]
        %v920 = vld [vmem:[%s908 + $0x40] sm:$0xf]
        %v921 = vld [vmem:[%s908 + $0x48] sm:$0xf]
        %v922 = vld [vmem:[%s908 + $0x4c] sm:$0xf]
        %v923 = vld [vmem:[%s908 + $0x54] sm:$0xf]
        %v924 = vld [vmem:[%s908 + $0x58] sm:$0xf]
        %s925 = scalar_lea.vmem %s1, 24
        %v926 = vld [vmem:[%s925] sm:$0xf]
        %v927 = vld [vmem:[%s925 + $0x4] sm:$0xf]
        %v944 = vunpack.c.l.b16 %v909
        %v945 = vunpack.c.l.b16 %v910
        %v946 = vunpack.c.l.b16 %v911
        %v947 = vunpack.c.l.b16 %v912
        %v948 = vunpack.c.l.b16 %v913
        %v949 = vunpack.c.l.b16 %v914
        %v950 = vunpack.c.l.b16 %v915
        %v951 = vunpack.c.l.b16 %v916
        %v952 = vunpack.c.l.b16 %v917
        %v953 = vunpack.c.l.b16 %v918
        %v954 = vunpack.c.l.b16 %v919
        %v955 = vunpack.c.l.b16 %v920
        %v956 = vunpack.c.l.b16 %v921
        %v957 = vunpack.c.l.b16 %v922
        %v958 = vunpack.c.l.b16 %v923
        %v959 = vunpack.c.l.b16 %v924
        %v960 = vpack.c.b16 %v945, %v944
        %v961 = vpack.c.b16 %v947, %v946
        %v962 = vpack.c.b16 %v949, %v948
        %v963 = vpack.c.b16 %v951, %v950
        %v964 = vpack.c.b16 %v953, %v952
        %v965 = vpack.c.b16 %v955, %v954
        %v966 = vpack.c.b16 %v957, %v956
        %v967 = vpack.c.b16 %v959, %v958
        %v970 = vunpack.c.l.b16 %v926
        %v971 = vunpack.c.l.b16 %v927
        %v972 = vpack.c.b16 %v971, %v970
        %v975 = vsel %vm510, %v960, 0
        %v978 = vsel %vm510, %v961, 0
        %v981 = vsel %vm510, %v962, 0
        %v984 = vsel %vm510, %v963, 0
        %v987 = vsel %vm510, %v964, 0
        %v990 = vsel %vm510, %v965, 0
        %v993 = vsel %vm510, %v966, 0
        %v996 = vsel %vm510, %v967, 0
        %998 = vmatpush.bf16.msra.mxu0 0
        %999 = vmatpush.bf16.msra.mxu0 0
        %1000 = vmatpush.bf16.msra.mxu0 0
        %1001 = vmatpush.bf16.msra.mxu0 0
        %1002 = vmatpush.bf16.msra.mxu0 0
        %1003 = vmatpush.bf16.msra.mxu0 0
        %1004 = vmatpush.bf16.msra.mxu0 0
        %1005 = vmatpush.bf16.msra.mxu0 %v972
        %1006 = vmatmul.bf16.gmra.mxu0 %v975
        %v1007 = vpop.f32.mrf.mxu0
        %v1008 = vadd.f32 0.0, %v1007
        %v1009 = vpop.f32.mrf.mxu0
        %v1010 = vadd.f32 0.0, %v1009
        %1011 = vmatmul.bf16.gmra.mxu0 %v978
        %v1012 = vpop.f32.mrf.mxu0
        %v1013 = vadd.f32 0.0, %v1012
        %v1014 = vpop.f32.mrf.mxu0
        %v1015 = vadd.f32 0.0, %v1014
        %1016 = vmatmul.bf16.gmra.mxu0 %v981
        %v1017 = vpop.f32.mrf.mxu0
        %v1018 = vadd.f32 0.0, %v1017
        %v1019 = vpop.f32.mrf.mxu0
        %v1020 = vadd.f32 0.0, %v1019
        %1021 = vmatmul.bf16.gmra.mxu0 %v984
        %v1022 = vpop.f32.mrf.mxu0
        %v1023 = vadd.f32 0.0, %v1022
        %v1024 = vpop.f32.mrf.mxu0
        %v1025 = vadd.f32 0.0, %v1024
        %1026 = vmatmul.bf16.gmra.mxu0 %v987
        %v1027 = vpop.f32.mrf.mxu0
        %v1028 = vadd.f32 0.0, %v1027
        %v1029 = vpop.f32.mrf.mxu0
        %v1030 = vadd.f32 0.0, %v1029
        %1031 = vmatmul.bf16.gmra.mxu0 %v990
        %v1032 = vpop.f32.mrf.mxu0
        %v1033 = vadd.f32 0.0, %v1032
        %v1034 = vpop.f32.mrf.mxu0
        %v1035 = vadd.f32 0.0, %v1034
        %1036 = vmatmul.bf16.gmra.mxu0 %v993
        %v1037 = vpop.f32.mrf.mxu0
        %v1038 = vadd.f32 0.0, %v1037
        %v1039 = vpop.f32.mrf.mxu0
        %v1040 = vadd.f32 0.0, %v1039
        %1041 = vmatmul.bf16.gmra.mxu0 %v996
        %v1042 = vpop.f32.mrf.mxu0
        %v1043 = vadd.f32 0.0, %v1042
        %v1044 = vpop.f32.mrf.mxu0
        %v1045 = vadd.f32 0.0, %v1044
        %1046 = vdwg.mxu0
        %v1047 = vadd.f32 %v892, %v1008
        %v1048 = vadd.f32 %v893, %v1010
        %v1049 = vadd.f32 %v894, %v1013
        %v1050 = vadd.f32 %v895, %v1015
        %v1051 = vadd.f32 %v896, %v1018
        %v1052 = vadd.f32 %v897, %v1020
        %v1053 = vadd.f32 %v898, %v1023
        %v1054 = vadd.f32 %v899, %v1025
        %v1055 = vadd.f32 %v900, %v1028
        %v1056 = vadd.f32 %v901, %v1030
        %v1057 = vadd.f32 %v902, %v1033
        %v1058 = vadd.f32 %v903, %v1035
        %v1059 = vadd.f32 %v904, %v1038
        %v1060 = vadd.f32 %v905, %v1040
        %v1061 = vadd.f32 %v906, %v1043
        %v1062 = vadd.f32 %v907, %v1045
        %v1063 = vld [vmem:[%s908] sm:$0xf]
        %v1064 = vld [vmem:[%s908 + $0x4] sm:$0xf]
        %v1065 = vld [vmem:[%s908 + $0x8] sm:$0x1]
        %v1066 = vld [vmem:[%s908 + $0xc] sm:$0xf]
        %v1067 = vld [vmem:[%s908 + $0x10] sm:$0xf]
        %v1068 = vld [vmem:[%s908 + $0x14] sm:$0x1]
        %v1069 = vld [vmem:[%s908 + $0x18] sm:$0xf]
        %v1070 = vld [vmem:[%s908 + $0x1c] sm:$0xf]
        %v1071 = vld [vmem:[%s908 + $0x20] sm:$0x1]
        %v1072 = vld [vmem:[%s908 + $0x24] sm:$0xf]
        %v1073 = vld [vmem:[%s908 + $0x28] sm:$0xf]
        %v1074 = vld [vmem:[%s908 + $0x2c] sm:$0x1]
        %v1075 = vld [vmem:[%s908 + $0x30] sm:$0xf]
        %v1076 = vld [vmem:[%s908 + $0x34] sm:$0xf]
        %v1077 = vld [vmem:[%s908 + $0x38] sm:$0x1]
        %v1078 = vld [vmem:[%s908 + $0x3c] sm:$0xf]
        %v1079 = vld [vmem:[%s908 + $0x40] sm:$0xf]
        %v1080 = vld [vmem:[%s908 + $0x44] sm:$0x1]
        %v1081 = vld [vmem:[%s908 + $0x48] sm:$0xf]
        %v1082 = vld [vmem:[%s908 + $0x4c] sm:$0xf]
        %v1083 = vld [vmem:[%s908 + $0x50] sm:$0x1]
        %v1084 = vld [vmem:[%s908 + $0x54] sm:$0xf]
        %v1085 = vld [vmem:[%s908 + $0x58] sm:$0xf]
        %v1086 = vld [vmem:[%s908 + $0x5c] sm:$0x1]
        %v1088 = vshrl.u32 %v1063, 16
        %v1090 = vrot.slane %v1088, 4
        %v1091 = vshll.u32 %v1063, 16
        %v1093 = vrot.slane %v1091, 5
        %v1094 = vor.u32 %v1090, %v1093
        %v1095 = vrot.slane %v1094, 4
        %v1097 = vshll.u32 %v1064, 16
        %v1099 = vrot.slane %v1097, 5
        %v1100 = vsel %vm284, %v1095, %v1099
        %v1101 = vshrl.u32 %v1064, 16
        %v1103 = vrot.slane %v1101, 4
        %v1104 = vor.u32 %v1103, %v1099
        %v1105 = vrot.slane %v1104, 4
        %v1107 = vshll.u32 %v1065, 16
        %v1109 = vrot.slane %v1107, 5
        %v1110 = vsel %vm284, %v1105, %v1109
        %v1112 = vshrl.u32 %v1066, 16
        %v1114 = vrot.slane %v1112, 4
        %v1115 = vshll.u32 %v1066, 16
        %v1117 = vrot.slane %v1115, 5
        %v1118 = vor.u32 %v1114, %v1117
        %v1119 = vrot.slane %v1118, 4
        %v1121 = vshll.u32 %v1067, 16
        %v1123 = vrot.slane %v1121, 5
        %v1124 = vsel %vm284, %v1119, %v1123
        %v1125 = vshrl.u32 %v1067, 16
        %v1127 = vrot.slane %v1125, 4
        %v1128 = vor.u32 %v1127, %v1123
        %v1129 = vrot.slane %v1128, 4
        %v1131 = vshll.u32 %v1068, 16
        %v1133 = vrot.slane %v1131, 5
        %v1134 = vsel %vm284, %v1129, %v1133
        %v1136 = vshrl.u32 %v1069, 16
        %v1138 = vrot.slane %v1136, 4
        %v1139 = vshll.u32 %v1069, 16
        %v1141 = vrot.slane %v1139, 5
        %v1142 = vor.u32 %v1138, %v1141
        %v1143 = vrot.slane %v1142, 4
        %v1145 = vshll.u32 %v1070, 16
        %v1147 = vrot.slane %v1145, 5
        %v1148 = vsel %vm284, %v1143, %v1147
        %v1149 = vshrl.u32 %v1070, 16
        %v1151 = vrot.slane %v1149, 4
        %v1152 = vor.u32 %v1151, %v1147
        %v1153 = vrot.slane %v1152, 4
        %v1155 = vshll.u32 %v1071, 16
        %v1157 = vrot.slane %v1155, 5
        %v1158 = vsel %vm284, %v1153, %v1157
        %v1160 = vshrl.u32 %v1072, 16
        %v1162 = vrot.slane %v1160, 4
        %v1163 = vshll.u32 %v1072, 16
        %v1165 = vrot.slane %v1163, 5
        %v1166 = vor.u32 %v1162, %v1165
        %v1167 = vrot.slane %v1166, 4
        %v1169 = vshll.u32 %v1073, 16
        %v1171 = vrot.slane %v1169, 5
        %v1172 = vsel %vm284, %v1167, %v1171
        %v1173 = vshrl.u32 %v1073, 16
        %v1175 = vrot.slane %v1173, 4
        %v1176 = vor.u32 %v1175, %v1171
        %v1177 = vrot.slane %v1176, 4
        %v1179 = vshll.u32 %v1074, 16
        %v1181 = vrot.slane %v1179, 5
        %v1182 = vsel %vm284, %v1177, %v1181
        %v1184 = vshrl.u32 %v1075, 16
        %v1186 = vrot.slane %v1184, 4
        %v1187 = vshll.u32 %v1075, 16
        %v1189 = vrot.slane %v1187, 5
        %v1190 = vor.u32 %v1186, %v1189
        %v1191 = vrot.slane %v1190, 4
        %v1193 = vshll.u32 %v1076, 16
        %v1195 = vrot.slane %v1193, 5
        %v1196 = vsel %vm284, %v1191, %v1195
        %v1197 = vshrl.u32 %v1076, 16
        %v1199 = vrot.slane %v1197, 4
        %v1200 = vor.u32 %v1199, %v1195
        %v1201 = vrot.slane %v1200, 4
        %v1203 = vshll.u32 %v1077, 16
        %v1205 = vrot.slane %v1203, 5
        %v1206 = vsel %vm284, %v1201, %v1205
        %v1208 = vshrl.u32 %v1078, 16
        %v1210 = vrot.slane %v1208, 4
        %v1211 = vshll.u32 %v1078, 16
        %v1213 = vrot.slane %v1211, 5
        %v1214 = vor.u32 %v1210, %v1213
        %v1215 = vrot.slane %v1214, 4
        %v1217 = vshll.u32 %v1079, 16
        %v1219 = vrot.slane %v1217, 5
        %v1220 = vsel %vm284, %v1215, %v1219
        %v1221 = vshrl.u32 %v1079, 16
        %v1223 = vrot.slane %v1221, 4
        %v1224 = vor.u32 %v1223, %v1219
        %v1225 = vrot.slane %v1224, 4
        %v1227 = vshll.u32 %v1080, 16
        %v1229 = vrot.slane %v1227, 5
        %v1230 = vsel %vm284, %v1225, %v1229
        %v1232 = vshrl.u32 %v1081, 16
        %v1234 = vrot.slane %v1232, 4
        %v1235 = vshll.u32 %v1081, 16
        %v1237 = vrot.slane %v1235, 5
        %v1238 = vor.u32 %v1234, %v1237
        %v1239 = vrot.slane %v1238, 4
        %v1241 = vshll.u32 %v1082, 16
        %v1243 = vrot.slane %v1241, 5
        %v1244 = vsel %vm284, %v1239, %v1243
        %v1245 = vshrl.u32 %v1082, 16
        %v1247 = vrot.slane %v1245, 4
        %v1248 = vor.u32 %v1247, %v1243
        %v1249 = vrot.slane %v1248, 4
        %v1251 = vshll.u32 %v1083, 16
        %v1253 = vrot.slane %v1251, 5
        %v1254 = vsel %vm284, %v1249, %v1253
        %v1256 = vshrl.u32 %v1084, 16
        %v1258 = vrot.slane %v1256, 4
        %v1259 = vshll.u32 %v1084, 16
        %v1261 = vrot.slane %v1259, 5
        %v1262 = vor.u32 %v1258, %v1261
        %v1263 = vrot.slane %v1262, 4
        %v1265 = vshll.u32 %v1085, 16
        %v1267 = vrot.slane %v1265, 5
        %v1268 = vsel %vm284, %v1263, %v1267
        %v1269 = vshrl.u32 %v1085, 16
        %v1271 = vrot.slane %v1269, 4
        %v1272 = vor.u32 %v1271, %v1267
        %v1273 = vrot.slane %v1272, 4
        %v1275 = vshll.u32 %v1086, 16
        %v1277 = vrot.slane %v1275, 5
        %v1278 = vsel %vm284, %v1273, %v1277
        %s1279 = scalar_lea.vmem %s1, 32
        %v1280 = vld [vmem:[%s1279] sm:$0xf]
        %v1281 = vld [vmem:[%s1279 + $0x4] sm:$0xf]
        %v1282 = vunpack.c.l.b16 %v1100
        %v1283 = vunpack.c.l.b16 %v1110
        %v1284 = vunpack.c.l.b16 %v1124
        %v1285 = vunpack.c.l.b16 %v1134
        %v1286 = vunpack.c.l.b16 %v1148
        %v1287 = vunpack.c.l.b16 %v1158
        %v1288 = vunpack.c.l.b16 %v1172
        %v1289 = vunpack.c.l.b16 %v1182
        %v1290 = vunpack.c.l.b16 %v1196
        %v1291 = vunpack.c.l.b16 %v1206
        %v1292 = vunpack.c.l.b16 %v1220
        %v1293 = vunpack.c.l.b16 %v1230
        %v1294 = vunpack.c.l.b16 %v1244
        %v1295 = vunpack.c.l.b16 %v1254
        %v1296 = vunpack.c.l.b16 %v1268
        %v1297 = vunpack.c.l.b16 %v1278
        %v1298 = vpack.c.b16 %v1283, %v1282
        %v1299 = vpack.c.b16 %v1285, %v1284
        %v1300 = vpack.c.b16 %v1287, %v1286
        %v1301 = vpack.c.b16 %v1289, %v1288
        %v1302 = vpack.c.b16 %v1291, %v1290
        %v1303 = vpack.c.b16 %v1293, %v1292
        %v1304 = vpack.c.b16 %v1295, %v1294
        %v1305 = vpack.c.b16 %v1297, %v1296
        %v1308 = vunpack.c.l.b16 %v1280
        %v1309 = vunpack.c.l.b16 %v1281
        %v1310 = vpack.c.b16 %v1309, %v1308
        %v1313 = vsel %vm510, %v1298, 0
        %v1316 = vsel %vm510, %v1299, 0
        %v1319 = vsel %vm510, %v1300, 0
        %v1322 = vsel %vm510, %v1301, 0
        %v1325 = vsel %vm510, %v1302, 0
        %v1328 = vsel %vm510, %v1303, 0
        %v1331 = vsel %vm510, %v1304, 0
        %v1334 = vsel %vm510, %v1305, 0
        %1336 = vmatpush.bf16.msra.mxu0 0
        %1337 = vmatpush.bf16.msra.mxu0 0
        %1338 = vmatpush.bf16.msra.mxu0 0
        %1339 = vmatpush.bf16.msra.mxu0 0
        %1340 = vmatpush.bf16.msra.mxu0 0
        %1341 = vmatpush.bf16.msra.mxu0 0
        %1342 = vmatpush.bf16.msra.mxu0 0
        %1343 = vmatpush.bf16.msra.mxu0 %v1310
        %1344 = vmatmul.bf16.gmra.mxu0 %v1313
        %v1345 = vpop.f32.mrf.mxu0
        %v1346 = vadd.f32 0.0, %v1345
        %v1347 = vpop.f32.mrf.mxu0
        %v1348 = vadd.f32 0.0, %v1347
        %1349 = vmatmul.bf16.gmra.mxu0 %v1316
        %v1350 = vpop.f32.mrf.mxu0
        %v1351 = vadd.f32 0.0, %v1350
        %v1352 = vpop.f32.mrf.mxu0
        %v1353 = vadd.f32 0.0, %v1352
        %1354 = vmatmul.bf16.gmra.mxu0 %v1319
        %v1355 = vpop.f32.mrf.mxu0
        %v1356 = vadd.f32 0.0, %v1355
        %v1357 = vpop.f32.mrf.mxu0
        %v1358 = vadd.f32 0.0, %v1357
        %1359 = vmatmul.bf16.gmra.mxu0 %v1322
        %v1360 = vpop.f32.mrf.mxu0
        %v1361 = vadd.f32 0.0, %v1360
        %v1362 = vpop.f32.mrf.mxu0
        %v1363 = vadd.f32 0.0, %v1362
        %1364 = vmatmul.bf16.gmra.mxu0 %v1325
        %v1365 = vpop.f32.mrf.mxu0
        %v1366 = vadd.f32 0.0, %v1365
        %v1367 = vpop.f32.mrf.mxu0
        %v1368 = vadd.f32 0.0, %v1367
        %1369 = vmatmul.bf16.gmra.mxu0 %v1328
        %v1370 = vpop.f32.mrf.mxu0
        %v1371 = vadd.f32 0.0, %v1370
        %v1372 = vpop.f32.mrf.mxu0
        %v1373 = vadd.f32 0.0, %v1372
        %1374 = vmatmul.bf16.gmra.mxu0 %v1331
        %v1375 = vpop.f32.mrf.mxu0
        %v1376 = vadd.f32 0.0, %v1375
        %v1377 = vpop.f32.mrf.mxu0
        %v1378 = vadd.f32 0.0, %v1377
        %1379 = vmatmul.bf16.gmra.mxu0 %v1334
        %v1380 = vpop.f32.mrf.mxu0
        %v1381 = vadd.f32 0.0, %v1380
        %v1382 = vpop.f32.mrf.mxu0
        %v1383 = vadd.f32 0.0, %v1382
        %1384 = vdwg.mxu0
        %v1385 = vadd.f32 %v1047, %v1346
        %v1386 = vadd.f32 %v1048, %v1348
        %v1387 = vadd.f32 %v1049, %v1351
        %v1388 = vadd.f32 %v1050, %v1353
        %v1389 = vadd.f32 %v1051, %v1356
        %v1390 = vadd.f32 %v1052, %v1358
        %v1391 = vadd.f32 %v1053, %v1361
        %v1392 = vadd.f32 %v1054, %v1363
        %v1393 = vadd.f32 %v1055, %v1366
        %v1394 = vadd.f32 %v1056, %v1368
        %v1395 = vadd.f32 %v1057, %v1371
        %v1396 = vadd.f32 %v1058, %v1373
        %v1397 = vadd.f32 %v1059, %v1376
        %v1398 = vadd.f32 %v1060, %v1378
        %v1399 = vadd.f32 %v1061, %v1381
        %v1400 = vadd.f32 %v1062, %v1383
        %v1401 = vld [vmem:[%s908] sm:$0xe]
        %v1402 = vld [vmem:[%s908 + $0xc] sm:$0xe]
        %v1403 = vld [vmem:[%s908 + $0x18] sm:$0xe]
        %v1404 = vld [vmem:[%s908 + $0x24] sm:$0xe]
        %v1405 = vld [vmem:[%s908 + $0x30] sm:$0xe]
        %v1406 = vld [vmem:[%s908 + $0x3c] sm:$0xe]
        %v1407 = vld [vmem:[%s908 + $0x48] sm:$0xe]
        %v1408 = vld [vmem:[%s908 + $0x54] sm:$0xe]
        %v1433 = vrot.slane %v1401, 5
        %v1434 = vrot.slane %v1433, 4
        %v1435 = vrot.slane %v1064, 5
        %v1436 = vsel %vm729, %v1434, %v1435
        %v1437 = vrot.slane %v1435, 4
        %v1438 = vrot.slane %v1065, 5
        %v1439 = vsel %vm729, %v1437, %v1438
        %v1440 = vrot.slane %v1402, 5
        %v1441 = vrot.slane %v1440, 4
        %v1442 = vrot.slane %v1067, 5
        %v1443 = vsel %vm729, %v1441, %v1442
        %v1444 = vrot.slane %v1442, 4
        %v1445 = vrot.slane %v1068, 5
        %v1446 = vsel %vm729, %v1444, %v1445
        %v1447 = vrot.slane %v1403, 5
        %v1448 = vrot.slane %v1447, 4
        %v1449 = vrot.slane %v1070, 5
        %v1450 = vsel %vm729, %v1448, %v1449
        %v1451 = vrot.slane %v1449, 4
        %v1452 = vrot.slane %v1071, 5
        %v1453 = vsel %vm729, %v1451, %v1452
        %v1454 = vrot.slane %v1404, 5
        %v1455 = vrot.slane %v1454, 4
        %v1456 = vrot.slane %v1073, 5
        %v1457 = vsel %vm729, %v1455, %v1456
        %v1458 = vrot.slane %v1456, 4
        %v1459 = vrot.slane %v1074, 5
        %v1460 = vsel %vm729, %v1458, %v1459
        %v1461 = vrot.slane %v1405, 5
        %v1462 = vrot.slane %v1461, 4
        %v1463 = vrot.slane %v1076, 5
        %v1464 = vsel %vm729, %v1462, %v1463
        %v1465 = vrot.slane %v1463, 4
        %v1466 = vrot.slane %v1077, 5
        %v1467 = vsel %vm729, %v1465, %v1466
        %v1468 = vrot.slane %v1406, 5
        %v1469 = vrot.slane %v1468, 4
        %v1470 = vrot.slane %v1079, 5
        %v1471 = vsel %vm729, %v1469, %v1470
        %v1472 = vrot.slane %v1470, 4
        %v1473 = vrot.slane %v1080, 5
        %v1474 = vsel %vm729, %v1472, %v1473
        %v1475 = vrot.slane %v1407, 5
        %v1476 = vrot.slane %v1475, 4
        %v1477 = vrot.slane %v1082, 5
        %v1478 = vsel %vm729, %v1476, %v1477
        %v1479 = vrot.slane %v1477, 4
        %v1480 = vrot.slane %v1083, 5
        %v1481 = vsel %vm729, %v1479, %v1480
        %v1482 = vrot.slane %v1408, 5
        %v1483 = vrot.slane %v1482, 4
        %v1484 = vrot.slane %v1085, 5
        %v1485 = vsel %vm729, %v1483, %v1484
        %v1486 = vrot.slane %v1484, 4
        %v1487 = vrot.slane %v1086, 5
        %v1488 = vsel %vm729, %v1486, %v1487
        %s1489 = scalar_lea.vmem %s1, 40
        %v1490 = vld [vmem:[%s1489] sm:$0xf]
        %v1491 = vld [vmem:[%s1489 + $0x4] sm:$0xf]
        %v1492 = vunpack.c.l.b16 %v1436
        %v1493 = vunpack.c.l.b16 %v1439
        %v1494 = vunpack.c.l.b16 %v1443
        %v1495 = vunpack.c.l.b16 %v1446
        %v1496 = vunpack.c.l.b16 %v1450
        %v1497 = vunpack.c.l.b16 %v1453
        %v1498 = vunpack.c.l.b16 %v1457
        %v1499 = vunpack.c.l.b16 %v1460
        %v1500 = vunpack.c.l.b16 %v1464
        %v1501 = vunpack.c.l.b16 %v1467
        %v1502 = vunpack.c.l.b16 %v1471
        %v1503 = vunpack.c.l.b16 %v1474
        %v1504 = vunpack.c.l.b16 %v1478
        %v1505 = vunpack.c.l.b16 %v1481
        %v1506 = vunpack.c.l.b16 %v1485
        %v1507 = vunpack.c.l.b16 %v1488
        %v1508 = vpack.c.b16 %v1493, %v1492
        %v1509 = vpack.c.b16 %v1495, %v1494
        %v1510 = vpack.c.b16 %v1497, %v1496
        %v1511 = vpack.c.b16 %v1499, %v1498
        %v1512 = vpack.c.b16 %v1501, %v1500
        %v1513 = vpack.c.b16 %v1503, %v1502
        %v1514 = vpack.c.b16 %v1505, %v1504
        %v1515 = vpack.c.b16 %v1507, %v1506
        %v1518 = vunpack.c.l.b16 %v1490
        %v1519 = vunpack.c.l.b16 %v1491
        %v1520 = vpack.c.b16 %v1519, %v1518
        %v1523 = vsel %vm510, %v1508, 0
        %v1526 = vsel %vm510, %v1509, 0
        %v1529 = vsel %vm510, %v1510, 0
        %v1532 = vsel %vm510, %v1511, 0
        %v1535 = vsel %vm510, %v1512, 0
        %v1538 = vsel %vm510, %v1513, 0
        %v1541 = vsel %vm510, %v1514, 0
        %v1544 = vsel %vm510, %v1515, 0
        %1546 = vmatpush.bf16.msra.mxu0 0
        %1547 = vmatpush.bf16.msra.mxu0 0
        %1548 = vmatpush.bf16.msra.mxu0 0
        %1549 = vmatpush.bf16.msra.mxu0 0
        %1550 = vmatpush.bf16.msra.mxu0 0
        %1551 = vmatpush.bf16.msra.mxu0 0
        %1552 = vmatpush.bf16.msra.mxu0 0
        %1553 = vmatpush.bf16.msra.mxu0 %v1520
        %1554 = vmatmul.bf16.gmra.mxu0 %v1523
        %v1555 = vpop.f32.mrf.mxu0
        %v1556 = vadd.f32 0.0, %v1555
        %v1557 = vpop.f32.mrf.mxu0
        %v1558 = vadd.f32 0.0, %v1557
        %1559 = vmatmul.bf16.gmra.mxu0 %v1526
        %v1560 = vpop.f32.mrf.mxu0
        %v1561 = vadd.f32 0.0, %v1560
        %v1562 = vpop.f32.mrf.mxu0
        %v1563 = vadd.f32 0.0, %v1562
        %1564 = vmatmul.bf16.gmra.mxu0 %v1529
        %v1565 = vpop.f32.mrf.mxu0
        %v1566 = vadd.f32 0.0, %v1565
        %v1567 = vpop.f32.mrf.mxu0
        %v1568 = vadd.f32 0.0, %v1567
        %1569 = vmatmul.bf16.gmra.mxu0 %v1532
        %v1570 = vpop.f32.mrf.mxu0
        %v1571 = vadd.f32 0.0, %v1570
        %v1572 = vpop.f32.mrf.mxu0
        %v1573 = vadd.f32 0.0, %v1572
        %1574 = vmatmul.bf16.gmra.mxu0 %v1535
        %v1575 = vpop.f32.mrf.mxu0
        %v1576 = vadd.f32 0.0, %v1575
        %v1577 = vpop.f32.mrf.mxu0
        %v1578 = vadd.f32 0.0, %v1577
        %1579 = vmatmul.bf16.gmra.mxu0 %v1538
        %v1580 = vpop.f32.mrf.mxu0
        %v1581 = vadd.f32 0.0, %v1580
        %v1582 = vpop.f32.mrf.mxu0
        %v1583 = vadd.f32 0.0, %v1582
        %1584 = vmatmul.bf16.gmra.mxu0 %v1541
        %v1585 = vpop.f32.mrf.mxu0
        %v1586 = vadd.f32 0.0, %v1585
        %v1587 = vpop.f32.mrf.mxu0
        %v1588 = vadd.f32 0.0, %v1587
        %1589 = vmatmul.bf16.gmra.mxu0 %v1544
        %v1590 = vpop.f32.mrf.mxu0
        %v1591 = vadd.f32 0.0, %v1590
        %v1592 = vpop.f32.mrf.mxu0
        %v1593 = vadd.f32 0.0, %v1592
        %1594 = vdwg.mxu0
        %v1595 = vadd.f32 %v1385, %v1556
        %v1596 = vadd.f32 %v1386, %v1558
        %v1597 = vadd.f32 %v1387, %v1561
        %v1598 = vadd.f32 %v1388, %v1563
        %v1599 = vadd.f32 %v1389, %v1566
        %v1600 = vadd.f32 %v1390, %v1568
        %v1601 = vadd.f32 %v1391, %v1571
        %v1602 = vadd.f32 %v1392, %v1573
        %v1603 = vadd.f32 %v1393, %v1576
        %v1604 = vadd.f32 %v1394, %v1578
        %v1605 = vadd.f32 %v1395, %v1581
        %v1606 = vadd.f32 %v1396, %v1583
        %v1607 = vadd.f32 %v1397, %v1586
        %v1608 = vadd.f32 %v1398, %v1588
        %v1609 = vadd.f32 %v1399, %v1591
        %v1610 = vadd.f32 %v1400, %v1593
        %s1611 = scalar_lea.vmem %s250, 24
        %v1612 = vld [vmem:[%s1611] sm:$0xf]
        %v1613 = vld [vmem:[%s1611 + $0x4] sm:$0xf]
        %v1614 = vld [vmem:[%s1611 + $0xc] sm:$0xf]
        %v1615 = vld [vmem:[%s1611 + $0x10] sm:$0xf]
        %v1616 = vld [vmem:[%s1611 + $0x18] sm:$0xf]
        %v1617 = vld [vmem:[%s1611 + $0x1c] sm:$0xf]
        %v1618 = vld [vmem:[%s1611 + $0x24] sm:$0xf]
        %v1619 = vld [vmem:[%s1611 + $0x28] sm:$0xf]
        %v1620 = vld [vmem:[%s1611 + $0x30] sm:$0xf]
        %v1621 = vld [vmem:[%s1611 + $0x34] sm:$0xf]
        %v1622 = vld [vmem:[%s1611 + $0x3c] sm:$0xf]
        %v1623 = vld [vmem:[%s1611 + $0x40] sm:$0xf]
        %v1624 = vld [vmem:[%s1611 + $0x48] sm:$0xf]
        %v1625 = vld [vmem:[%s1611 + $0x4c] sm:$0xf]
        %v1626 = vld [vmem:[%s1611 + $0x54] sm:$0xf]
        %v1627 = vld [vmem:[%s1611 + $0x58] sm:$0xf]
        %s1628 = scalar_lea.vmem %s1, 48
        %v1629 = vld [vmem:[%s1628] sm:$0xf]
        %v1630 = vld [vmem:[%s1628 + $0x4] sm:$0xf]
        %v1647 = vunpack.c.l.b16 %v1612
        %v1648 = vunpack.c.l.b16 %v1613
        %v1649 = vunpack.c.l.b16 %v1614
        %v1650 = vunpack.c.l.b16 %v1615
        %v1651 = vunpack.c.l.b16 %v1616
        %v1652 = vunpack.c.l.b16 %v1617
        %v1653 = vunpack.c.l.b16 %v1618
        %v1654 = vunpack.c.l.b16 %v1619
        %v1655 = vunpack.c.l.b16 %v1620
        %v1656 = vunpack.c.l.b16 %v1621
        %v1657 = vunpack.c.l.b16 %v1622
        %v1658 = vunpack.c.l.b16 %v1623
        %v1659 = vunpack.c.l.b16 %v1624
        %v1660 = vunpack.c.l.b16 %v1625
        %v1661 = vunpack.c.l.b16 %v1626
        %v1662 = vunpack.c.l.b16 %v1627
        %v1663 = vpack.c.b16 %v1648, %v1647
        %v1664 = vpack.c.b16 %v1650, %v1649
        %v1665 = vpack.c.b16 %v1652, %v1651
        %v1666 = vpack.c.b16 %v1654, %v1653
        %v1667 = vpack.c.b16 %v1656, %v1655
        %v1668 = vpack.c.b16 %v1658, %v1657
        %v1669 = vpack.c.b16 %v1660, %v1659
        %v1670 = vpack.c.b16 %v1662, %v1661
        %v1673 = vunpack.c.l.b16 %v1629
        %v1674 = vunpack.c.l.b16 %v1630
        %v1675 = vpack.c.b16 %v1674, %v1673
        %v1678 = vsel %vm510, %v1663, 0
        %v1681 = vsel %vm510, %v1664, 0
        %v1684 = vsel %vm510, %v1665, 0
        %v1687 = vsel %vm510, %v1666, 0
        %v1690 = vsel %vm510, %v1667, 0
        %v1693 = vsel %vm510, %v1668, 0
        %v1696 = vsel %vm510, %v1669, 0
        %v1699 = vsel %vm510, %v1670, 0
        %1701 = vmatpush.bf16.msra.mxu0 0
        %1702 = vmatpush.bf16.msra.mxu0 0
        %1703 = vmatpush.bf16.msra.mxu0 0
        %1704 = vmatpush.bf16.msra.mxu0 0
        %1705 = vmatpush.bf16.msra.mxu0 0
        %1706 = vmatpush.bf16.msra.mxu0 0
        %1707 = vmatpush.bf16.msra.mxu0 0
        %1708 = vmatpush.bf16.msra.mxu0 %v1675
        %1709 = vmatmul.bf16.gmra.mxu0 %v1678
        %v1710 = vpop.f32.mrf.mxu0
        %v1711 = vadd.f32 0.0, %v1710
        %v1712 = vpop.f32.mrf.mxu0
        %v1713 = vadd.f32 0.0, %v1712
        %1714 = vmatmul.bf16.gmra.mxu0 %v1681
        %v1715 = vpop.f32.mrf.mxu0
        %v1716 = vadd.f32 0.0, %v1715
        %v1717 = vpop.f32.mrf.mxu0
        %v1718 = vadd.f32 0.0, %v1717
        %1719 = vmatmul.bf16.gmra.mxu0 %v1684
        %v1720 = vpop.f32.mrf.mxu0
        %v1721 = vadd.f32 0.0, %v1720
        %v1722 = vpop.f32.mrf.mxu0
        %v1723 = vadd.f32 0.0, %v1722
        %1724 = vmatmul.bf16.gmra.mxu0 %v1687
        %v1725 = vpop.f32.mrf.mxu0
        %v1726 = vadd.f32 0.0, %v1725
        %v1727 = vpop.f32.mrf.mxu0
        %v1728 = vadd.f32 0.0, %v1727
        %1729 = vmatmul.bf16.gmra.mxu0 %v1690
        %v1730 = vpop.f32.mrf.mxu0
        %v1731 = vadd.f32 0.0, %v1730
        %v1732 = vpop.f32.mrf.mxu0
        %v1733 = vadd.f32 0.0, %v1732
        %1734 = vmatmul.bf16.gmra.mxu0 %v1693
        %v1735 = vpop.f32.mrf.mxu0
        %v1736 = vadd.f32 0.0, %v1735
        %v1737 = vpop.f32.mrf.mxu0
        %v1738 = vadd.f32 0.0, %v1737
        %1739 = vmatmul.bf16.gmra.mxu0 %v1696
        %v1740 = vpop.f32.mrf.mxu0
        %v1741 = vadd.f32 0.0, %v1740
        %v1742 = vpop.f32.mrf.mxu0
        %v1743 = vadd.f32 0.0, %v1742
        %1744 = vmatmul.bf16.gmra.mxu0 %v1699
        %v1745 = vpop.f32.mrf.mxu0
        %v1746 = vadd.f32 0.0, %v1745
        %v1747 = vpop.f32.mrf.mxu0
        %v1748 = vadd.f32 0.0, %v1747
        %1749 = vdwg.mxu0
        %v1750 = vadd.f32 %v1595, %v1711
        %v1751 = vadd.f32 %v1596, %v1713
        %v1752 = vadd.f32 %v1597, %v1716
        %v1753 = vadd.f32 %v1598, %v1718
        %v1754 = vadd.f32 %v1599, %v1721
        %v1755 = vadd.f32 %v1600, %v1723
        %v1756 = vadd.f32 %v1601, %v1726
        %v1757 = vadd.f32 %v1602, %v1728
        %v1758 = vadd.f32 %v1603, %v1731
        %v1759 = vadd.f32 %v1604, %v1733
        %v1760 = vadd.f32 %v1605, %v1736
        %v1761 = vadd.f32 %v1606, %v1738
        %v1762 = vadd.f32 %v1607, %v1741
        %v1763 = vadd.f32 %v1608, %v1743
        %v1764 = vadd.f32 %v1609, %v1746
        %v1765 = vadd.f32 %v1610, %v1748
        %v1766 = vld [vmem:[%s1611] sm:$0xf]
        %v1767 = vld [vmem:[%s1611 + $0x4] sm:$0xf]
        %v1768 = vld [vmem:[%s1611 + $0x8] sm:$0x1]
        %v1769 = vld [vmem:[%s1611 + $0xc] sm:$0xf]
        %v1770 = vld [vmem:[%s1611 + $0x10] sm:$0xf]
        %v1771 = vld [vmem:[%s1611 + $0x14] sm:$0x1]
        %v1772 = vld [vmem:[%s1611 + $0x18] sm:$0xf]
        %v1773 = vld [vmem:[%s1611 + $0x1c] sm:$0xf]
        %v1774 = vld [vmem:[%s1611 + $0x20] sm:$0x1]
        %v1775 = vld [vmem:[%s1611 + $0x24] sm:$0xf]
        %v1776 = vld [vmem:[%s1611 + $0x28] sm:$0xf]
        %v1777 = vld [vmem:[%s1611 + $0x2c] sm:$0x1]
        %v1778 = vld [vmem:[%s1611 + $0x30] sm:$0xf]
        %v1779 = vld [vmem:[%s1611 + $0x34] sm:$0xf]
        %v1780 = vld [vmem:[%s1611 + $0x38] sm:$0x1]
        %v1781 = vld [vmem:[%s1611 + $0x3c] sm:$0xf]
        %v1782 = vld [vmem:[%s1611 + $0x40] sm:$0xf]
        %v1783 = vld [vmem:[%s1611 + $0x44] sm:$0x1]
        %v1784 = vld [vmem:[%s1611 + $0x48] sm:$0xf]
        %v1785 = vld [vmem:[%s1611 + $0x4c] sm:$0xf]
        %v1786 = vld [vmem:[%s1611 + $0x50] sm:$0x1]
        %v1787 = vld [vmem:[%s1611 + $0x54] sm:$0xf]
        %v1788 = vld [vmem:[%s1611 + $0x58] sm:$0xf]
        %v1789 = vld [vmem:[%s1611 + $0x5c] sm:$0x1]
        %v1791 = vshrl.u32 %v1766, 16
        %v1793 = vrot.slane %v1791, 4
        %v1794 = vshll.u32 %v1766, 16
        %v1796 = vrot.slane %v1794, 5
        %v1797 = vor.u32 %v1793, %v1796
        %v1798 = vrot.slane %v1797, 4
        %v1800 = vshll.u32 %v1767, 16
        %v1802 = vrot.slane %v1800, 5
        %v1803 = vsel %vm284, %v1798, %v1802
        %v1804 = vshrl.u32 %v1767, 16
        %v1806 = vrot.slane %v1804, 4
        %v1807 = vor.u32 %v1806, %v1802
        %v1808 = vrot.slane %v1807, 4
        %v1810 = vshll.u32 %v1768, 16
        %v1812 = vrot.slane %v1810, 5
        %v1813 = vsel %vm284, %v1808, %v1812
        %v1815 = vshrl.u32 %v1769, 16
        %v1817 = vrot.slane %v1815, 4
        %v1818 = vshll.u32 %v1769, 16
        %v1820 = vrot.slane %v1818, 5
        %v1821 = vor.u32 %v1817, %v1820
        %v1822 = vrot.slane %v1821, 4
        %v1824 = vshll.u32 %v1770, 16
        %v1826 = vrot.slane %v1824, 5
        %v1827 = vsel %vm284, %v1822, %v1826
        %v1828 = vshrl.u32 %v1770, 16
        %v1830 = vrot.slane %v1828, 4
        %v1831 = vor.u32 %v1830, %v1826
        %v1832 = vrot.slane %v1831, 4
        %v1834 = vshll.u32 %v1771, 16
        %v1836 = vrot.slane %v1834, 5
        %v1837 = vsel %vm284, %v1832, %v1836
        %v1839 = vshrl.u32 %v1772, 16
        %v1841 = vrot.slane %v1839, 4
        %v1842 = vshll.u32 %v1772, 16
        %v1844 = vrot.slane %v1842, 5
        %v1845 = vor.u32 %v1841, %v1844
        %v1846 = vrot.slane %v1845, 4
        %v1848 = vshll.u32 %v1773, 16
        %v1850 = vrot.slane %v1848, 5
        %v1851 = vsel %vm284, %v1846, %v1850
        %v1852 = vshrl.u32 %v1773, 16
        %v1854 = vrot.slane %v1852, 4
        %v1855 = vor.u32 %v1854, %v1850
        %v1856 = vrot.slane %v1855, 4
        %v1858 = vshll.u32 %v1774, 16
        %v1860 = vrot.slane %v1858, 5
        %v1861 = vsel %vm284, %v1856, %v1860
        %v1863 = vshrl.u32 %v1775, 16
        %v1865 = vrot.slane %v1863, 4
        %v1866 = vshll.u32 %v1775, 16
        %v1868 = vrot.slane %v1866, 5
        %v1869 = vor.u32 %v1865, %v1868
        %v1870 = vrot.slane %v1869, 4
        %v1872 = vshll.u32 %v1776, 16
        %v1874 = vrot.slane %v1872, 5
        %v1875 = vsel %vm284, %v1870, %v1874
        %v1876 = vshrl.u32 %v1776, 16
        %v1878 = vrot.slane %v1876, 4
        %v1879 = vor.u32 %v1878, %v1874
        %v1880 = vrot.slane %v1879, 4
        %v1882 = vshll.u32 %v1777, 16
        %v1884 = vrot.slane %v1882, 5
        %v1885 = vsel %vm284, %v1880, %v1884
        %v1887 = vshrl.u32 %v1778, 16
        %v1889 = vrot.slane %v1887, 4
        %v1890 = vshll.u32 %v1778, 16
        %v1892 = vrot.slane %v1890, 5
        %v1893 = vor.u32 %v1889, %v1892
        %v1894 = vrot.slane %v1893, 4
        %v1896 = vshll.u32 %v1779, 16
        %v1898 = vrot.slane %v1896, 5
        %v1899 = vsel %vm284, %v1894, %v1898
        %v1900 = vshrl.u32 %v1779, 16
        %v1902 = vrot.slane %v1900, 4
        %v1903 = vor.u32 %v1902, %v1898
        %v1904 = vrot.slane %v1903, 4
        %v1906 = vshll.u32 %v1780, 16
        %v1908 = vrot.slane %v1906, 5
        %v1909 = vsel %vm284, %v1904, %v1908
        %v1911 = vshrl.u32 %v1781, 16
        %v1913 = vrot.slane %v1911, 4
        %v1914 = vshll.u32 %v1781, 16
        %v1916 = vrot.slane %v1914, 5
        %v1917 = vor.u32 %v1913, %v1916
        %v1918 = vrot.slane %v1917, 4
        %v1920 = vshll.u32 %v1782, 16
        %v1922 = vrot.slane %v1920, 5
        %v1923 = vsel %vm284, %v1918, %v1922
        %v1924 = vshrl.u32 %v1782, 16
        %v1926 = vrot.slane %v1924, 4
        %v1927 = vor.u32 %v1926, %v1922
        %v1928 = vrot.slane %v1927, 4
        %v1930 = vshll.u32 %v1783, 16
        %v1932 = vrot.slane %v1930, 5
        %v1933 = vsel %vm284, %v1928, %v1932
        %v1935 = vshrl.u32 %v1784, 16
        %v1937 = vrot.slane %v1935, 4
        %v1938 = vshll.u32 %v1784, 16
        %v1940 = vrot.slane %v1938, 5
        %v1941 = vor.u32 %v1937, %v1940
        %v1942 = vrot.slane %v1941, 4
        %v1944 = vshll.u32 %v1785, 16
        %v1946 = vrot.slane %v1944, 5
        %v1947 = vsel %vm284, %v1942, %v1946
        %v1948 = vshrl.u32 %v1785, 16
        %v1950 = vrot.slane %v1948, 4
        %v1951 = vor.u32 %v1950, %v1946
        %v1952 = vrot.slane %v1951, 4
        %v1954 = vshll.u32 %v1786, 16
        %v1956 = vrot.slane %v1954, 5
        %v1957 = vsel %vm284, %v1952, %v1956
        %v1959 = vshrl.u32 %v1787, 16
        %v1961 = vrot.slane %v1959, 4
        %v1962 = vshll.u32 %v1787, 16
        %v1964 = vrot.slane %v1962, 5
        %v1965 = vor.u32 %v1961, %v1964
        %v1966 = vrot.slane %v1965, 4
        %v1968 = vshll.u32 %v1788, 16
        %v1970 = vrot.slane %v1968, 5
        %v1971 = vsel %vm284, %v1966, %v1970
        %v1972 = vshrl.u32 %v1788, 16
        %v1974 = vrot.slane %v1972, 4
        %v1975 = vor.u32 %v1974, %v1970
        %v1976 = vrot.slane %v1975, 4
        %v1978 = vshll.u32 %v1789, 16
        %v1980 = vrot.slane %v1978, 5
        %v1981 = vsel %vm284, %v1976, %v1980
        %s1982 = scalar_lea.vmem %s1, 56
        %v1983 = vld [vmem:[%s1982] sm:$0xf]
        %v1984 = vld [vmem:[%s1982 + $0x4] sm:$0xf]
        %v1985 = vunpack.c.l.b16 %v1803
        %v1986 = vunpack.c.l.b16 %v1813
        %v1987 = vunpack.c.l.b16 %v1827
        %v1988 = vunpack.c.l.b16 %v1837
        %v1989 = vunpack.c.l.b16 %v1851
        %v1990 = vunpack.c.l.b16 %v1861
        %v1991 = vunpack.c.l.b16 %v1875
        %v1992 = vunpack.c.l.b16 %v1885
        %v1993 = vunpack.c.l.b16 %v1899
        %v1994 = vunpack.c.l.b16 %v1909
        %v1995 = vunpack.c.l.b16 %v1923
        %v1996 = vunpack.c.l.b16 %v1933
        %v1997 = vunpack.c.l.b16 %v1947
        %v1998 = vunpack.c.l.b16 %v1957
        %v1999 = vunpack.c.l.b16 %v1971
        %v2000 = vunpack.c.l.b16 %v1981
        %v2001 = vpack.c.b16 %v1986, %v1985
        %v2002 = vpack.c.b16 %v1988, %v1987
        %v2003 = vpack.c.b16 %v1990, %v1989
        %v2004 = vpack.c.b16 %v1992, %v1991
        %v2005 = vpack.c.b16 %v1994, %v1993
        %v2006 = vpack.c.b16 %v1996, %v1995
        %v2007 = vpack.c.b16 %v1998, %v1997
        %v2008 = vpack.c.b16 %v2000, %v1999
        %v2011 = vunpack.c.l.b16 %v1983
        %v2012 = vunpack.c.l.b16 %v1984
        %v2013 = vpack.c.b16 %v2012, %v2011
        %v2016 = vsel %vm510, %v2001, 0
        %v2019 = vsel %vm510, %v2002, 0
        %v2022 = vsel %vm510, %v2003, 0
        %v2025 = vsel %vm510, %v2004, 0
        %v2028 = vsel %vm510, %v2005, 0
        %v2031 = vsel %vm510, %v2006, 0
        %v2034 = vsel %vm510, %v2007, 0
        %v2037 = vsel %vm510, %v2008, 0
        %2039 = vmatpush.bf16.msra.mxu0 0
        %2040 = vmatpush.bf16.msra.mxu0 0
        %2041 = vmatpush.bf16.msra.mxu0 0
        %2042 = vmatpush.bf16.msra.mxu0 0
        %2043 = vmatpush.bf16.msra.mxu0 0
        %2044 = vmatpush.bf16.msra.mxu0 0
        %2045 = vmatpush.bf16.msra.mxu0 0
        %2046 = vmatpush.bf16.msra.mxu0 %v2013
        %2047 = vmatmul.bf16.gmra.mxu0 %v2016
        %v2048 = vpop.f32.mrf.mxu0
        %v2049 = vadd.f32 0.0, %v2048
        %v2050 = vpop.f32.mrf.mxu0
        %v2051 = vadd.f32 0.0, %v2050
        %2052 = vmatmul.bf16.gmra.mxu0 %v2019
        %v2053 = vpop.f32.mrf.mxu0
        %v2054 = vadd.f32 0.0, %v2053
        %v2055 = vpop.f32.mrf.mxu0
        %v2056 = vadd.f32 0.0, %v2055
        %2057 = vmatmul.bf16.gmra.mxu0 %v2022
        %v2058 = vpop.f32.mrf.mxu0
        %v2059 = vadd.f32 0.0, %v2058
        %v2060 = vpop.f32.mrf.mxu0
        %v2061 = vadd.f32 0.0, %v2060
        %2062 = vmatmul.bf16.gmra.mxu0 %v2025
        %v2063 = vpop.f32.mrf.mxu0
        %v2064 = vadd.f32 0.0, %v2063
        %v2065 = vpop.f32.mrf.mxu0
        %v2066 = vadd.f32 0.0, %v2065
        %2067 = vmatmul.bf16.gmra.mxu0 %v2028
        %v2068 = vpop.f32.mrf.mxu0
        %v2069 = vadd.f32 0.0, %v2068
        %v2070 = vpop.f32.mrf.mxu0
        %v2071 = vadd.f32 0.0, %v2070
        %2072 = vmatmul.bf16.gmra.mxu0 %v2031
        %v2073 = vpop.f32.mrf.mxu0
        %v2074 = vadd.f32 0.0, %v2073
        %v2075 = vpop.f32.mrf.mxu0
        %v2076 = vadd.f32 0.0, %v2075
        %2077 = vmatmul.bf16.gmra.mxu0 %v2034
        %v2078 = vpop.f32.mrf.mxu0
        %v2079 = vadd.f32 0.0, %v2078
        %v2080 = vpop.f32.mrf.mxu0
        %v2081 = vadd.f32 0.0, %v2080
        %2082 = vmatmul.bf16.gmra.mxu0 %v2037
        %v2083 = vpop.f32.mrf.mxu0
        %v2084 = vadd.f32 0.0, %v2083
        %v2085 = vpop.f32.mrf.mxu0
        %v2086 = vadd.f32 0.0, %v2085
        %2087 = vdwg.mxu0
        %v2088 = vadd.f32 %v1750, %v2049
        %v2089 = vadd.f32 %v1751, %v2051
        %v2090 = vadd.f32 %v1752, %v2054
        %v2091 = vadd.f32 %v1753, %v2056
        %v2092 = vadd.f32 %v1754, %v2059
        %v2093 = vadd.f32 %v1755, %v2061
        %v2094 = vadd.f32 %v1756, %v2064
        %v2095 = vadd.f32 %v1757, %v2066
        %v2096 = vadd.f32 %v1758, %v2069
        %v2097 = vadd.f32 %v1759, %v2071
        %v2098 = vadd.f32 %v1760, %v2074
        %v2099 = vadd.f32 %v1761, %v2076
        %v2100 = vadd.f32 %v1762, %v2079
        %v2101 = vadd.f32 %v1763, %v2081
        %v2102 = vadd.f32 %v1764, %v2084
        %v2103 = vadd.f32 %v1765, %v2086
        %v2104 = vld [vmem:[%s1611] sm:$0xe]
        %v2105 = vld [vmem:[%s1611 + $0xc] sm:$0xe]
        %v2106 = vld [vmem:[%s1611 + $0x18] sm:$0xe]
        %v2107 = vld [vmem:[%s1611 + $0x24] sm:$0xe]
        %v2108 = vld [vmem:[%s1611 + $0x30] sm:$0xe]
        %v2109 = vld [vmem:[%s1611 + $0x3c] sm:$0xe]
        %v2110 = vld [vmem:[%s1611 + $0x48] sm:$0xe]
        %v2111 = vld [vmem:[%s1611 + $0x54] sm:$0xe]
        %v2136 = vrot.slane %v2104, 5
        %v2137 = vrot.slane %v2136, 4
        %v2138 = vrot.slane %v1767, 5
        %v2139 = vsel %vm729, %v2137, %v2138
        %v2140 = vrot.slane %v2138, 4
        %v2141 = vrot.slane %v1768, 5
        %v2142 = vsel %vm729, %v2140, %v2141
        %v2143 = vrot.slane %v2105, 5
        %v2144 = vrot.slane %v2143, 4
        %v2145 = vrot.slane %v1770, 5
        %v2146 = vsel %vm729, %v2144, %v2145
        %v2147 = vrot.slane %v2145, 4
        %v2148 = vrot.slane %v1771, 5
        %v2149 = vsel %vm729, %v2147, %v2148
        %v2150 = vrot.slane %v2106, 5
        %v2151 = vrot.slane %v2150, 4
        %v2152 = vrot.slane %v1773, 5
        %v2153 = vsel %vm729, %v2151, %v2152
        %v2154 = vrot.slane %v2152, 4
        %v2155 = vrot.slane %v1774, 5
        %v2156 = vsel %vm729, %v2154, %v2155
        %v2157 = vrot.slane %v2107, 5
        %v2158 = vrot.slane %v2157, 4
        %v2159 = vrot.slane %v1776, 5
        %v2160 = vsel %vm729, %v2158, %v2159
        %v2161 = vrot.slane %v2159, 4
        %v2162 = vrot.slane %v1777, 5
        %v2163 = vsel %vm729, %v2161, %v2162
        %v2164 = vrot.slane %v2108, 5
        %v2165 = vrot.slane %v2164, 4
        %v2166 = vrot.slane %v1779, 5
        %v2167 = vsel %vm729, %v2165, %v2166
        %v2168 = vrot.slane %v2166, 4
        %v2169 = vrot.slane %v1780, 5
        %v2170 = vsel %vm729, %v2168, %v2169
        %v2171 = vrot.slane %v2109, 5
        %v2172 = vrot.slane %v2171, 4
        %v2173 = vrot.slane %v1782, 5
        %v2174 = vsel %vm729, %v2172, %v2173
        %v2175 = vrot.slane %v2173, 4
        %v2176 = vrot.slane %v1783, 5
        %v2177 = vsel %vm729, %v2175, %v2176
        %v2178 = vrot.slane %v2110, 5
        %v2179 = vrot.slane %v2178, 4
        %v2180 = vrot.slane %v1785, 5
        %v2181 = vsel %vm729, %v2179, %v2180
        %v2182 = vrot.slane %v2180, 4
        %v2183 = vrot.slane %v1786, 5
        %v2184 = vsel %vm729, %v2182, %v2183
        %v2185 = vrot.slane %v2111, 5
        %v2186 = vrot.slane %v2185, 4
        %v2187 = vrot.slane %v1788, 5
        %v2188 = vsel %vm729, %v2186, %v2187
        %v2189 = vrot.slane %v2187, 4
        %v2190 = vrot.slane %v1789, 5
        %v2191 = vsel %vm729, %v2189, %v2190
        %s2192 = scalar_lea.vmem %s1, 64
        %v2193 = vld [vmem:[%s2192] sm:$0xf]
        %v2194 = vld [vmem:[%s2192 + $0x4] sm:$0xf]
        %v2195 = vunpack.c.l.b16 %v2139
        %v2196 = vunpack.c.l.b16 %v2142
        %v2197 = vunpack.c.l.b16 %v2146
        %v2198 = vunpack.c.l.b16 %v2149
        %v2199 = vunpack.c.l.b16 %v2153
        %v2200 = vunpack.c.l.b16 %v2156
        %v2201 = vunpack.c.l.b16 %v2160
        %v2202 = vunpack.c.l.b16 %v2163
        %v2203 = vunpack.c.l.b16 %v2167
        %v2204 = vunpack.c.l.b16 %v2170
        %v2205 = vunpack.c.l.b16 %v2174
        %v2206 = vunpack.c.l.b16 %v2177
        %v2207 = vunpack.c.l.b16 %v2181
        %v2208 = vunpack.c.l.b16 %v2184
        %v2209 = vunpack.c.l.b16 %v2188
        %v2210 = vunpack.c.l.b16 %v2191
        %v2211 = vpack.c.b16 %v2196, %v2195
        %v2212 = vpack.c.b16 %v2198, %v2197
        %v2213 = vpack.c.b16 %v2200, %v2199
        %v2214 = vpack.c.b16 %v2202, %v2201
        %v2215 = vpack.c.b16 %v2204, %v2203
        %v2216 = vpack.c.b16 %v2206, %v2205
        %v2217 = vpack.c.b16 %v2208, %v2207
        %v2218 = vpack.c.b16 %v2210, %v2209
        %v2221 = vunpack.c.l.b16 %v2193
        %v2222 = vunpack.c.l.b16 %v2194
        %v2223 = vpack.c.b16 %v2222, %v2221
        %v2226 = vsel %vm510, %v2211, 0
        %v2229 = vsel %vm510, %v2212, 0
        %v2232 = vsel %vm510, %v2213, 0
        %v2235 = vsel %vm510, %v2214, 0
        %v2238 = vsel %vm510, %v2215, 0
        %v2241 = vsel %vm510, %v2216, 0
        %v2244 = vsel %vm510, %v2217, 0
        %v2247 = vsel %vm510, %v2218, 0
        %2249 = vmatpush.bf16.msra.mxu0 0
        %2250 = vmatpush.bf16.msra.mxu0 0
        %2251 = vmatpush.bf16.msra.mxu0 0
        %2252 = vmatpush.bf16.msra.mxu0 0
        %2253 = vmatpush.bf16.msra.mxu0 0
        %2254 = vmatpush.bf16.msra.mxu0 0
        %2255 = vmatpush.bf16.msra.mxu0 0
        %2256 = vmatpush.bf16.msra.mxu0 %v2223
        %2257 = vmatmul.bf16.gmra.mxu0 %v2226
        %v2258 = vpop.f32.mrf.mxu0
        %v2259 = vadd.f32 0.0, %v2258
        %v2260 = vpop.f32.mrf.mxu0
        %v2261 = vadd.f32 0.0, %v2260
        %2262 = vmatmul.bf16.gmra.mxu0 %v2229
        %v2263 = vpop.f32.mrf.mxu0
        %v2264 = vadd.f32 0.0, %v2263
        %v2265 = vpop.f32.mrf.mxu0
        %v2266 = vadd.f32 0.0, %v2265
        %2267 = vmatmul.bf16.gmra.mxu0 %v2232
        %v2268 = vpop.f32.mrf.mxu0
        %v2269 = vadd.f32 0.0, %v2268
        %v2270 = vpop.f32.mrf.mxu0
        %v2271 = vadd.f32 0.0, %v2270
        %2272 = vmatmul.bf16.gmra.mxu0 %v2235
        %v2273 = vpop.f32.mrf.mxu0
        %v2274 = vadd.f32 0.0, %v2273
        %v2275 = vpop.f32.mrf.mxu0
        %v2276 = vadd.f32 0.0, %v2275
        %2277 = vmatmul.bf16.gmra.mxu0 %v2238
        %v2278 = vpop.f32.mrf.mxu0
        %v2279 = vadd.f32 0.0, %v2278
        %v2280 = vpop.f32.mrf.mxu0
        %v2281 = vadd.f32 0.0, %v2280
        %2282 = vmatmul.bf16.gmra.mxu0 %v2241
        %v2283 = vpop.f32.mrf.mxu0
        %v2284 = vadd.f32 0.0, %v2283
        %v2285 = vpop.f32.mrf.mxu0
        %v2286 = vadd.f32 0.0, %v2285
        %2287 = vmatmul.bf16.gmra.mxu0 %v2244
        %v2288 = vpop.f32.mrf.mxu0
        %v2289 = vadd.f32 0.0, %v2288
        %v2290 = vpop.f32.mrf.mxu0
        %v2291 = vadd.f32 0.0, %v2290
        %2292 = vmatmul.bf16.gmra.mxu0 %v2247
        %v2293 = vpop.f32.mrf.mxu0
        %v2294 = vadd.f32 0.0, %v2293
        %v2295 = vpop.f32.mrf.mxu0
        %v2296 = vadd.f32 0.0, %v2295
        %2297 = vdwg.mxu0
        %v2298 = vadd.f32 %v2088, %v2259
        %v2299 = vadd.f32 %v2089, %v2261
        %v2300 = vadd.f32 %v2090, %v2264
        %v2301 = vadd.f32 %v2091, %v2266
        %v2302 = vadd.f32 %v2092, %v2269
        %v2303 = vadd.f32 %v2093, %v2271
        %v2304 = vadd.f32 %v2094, %v2274
        %v2305 = vadd.f32 %v2095, %v2276
        %v2306 = vadd.f32 %v2096, %v2279
        %v2307 = vadd.f32 %v2097, %v2281
        %v2308 = vadd.f32 %v2098, %v2284
        %v2309 = vadd.f32 %v2099, %v2286
        %v2310 = vadd.f32 %v2100, %v2289
        %v2311 = vadd.f32 %v2101, %v2291
        %v2312 = vadd.f32 %v2102, %v2294
        %v2313 = vadd.f32 %v2103, %v2296
        %v2314 = vld [vmem:[%s2] sm:$0x1]
        %v2316 = vperm.slane %v2314, 0
        %v2318 = vadd.f32 %v2298, %v2316
        %v2319 = vadd.f32 %v2299, %v2316
        %v2320 = vadd.f32 %v2300, %v2316
        %v2321 = vadd.f32 %v2301, %v2316
        %v2322 = vadd.f32 %v2302, %v2316
        %v2323 = vadd.f32 %v2303, %v2316
        %v2324 = vadd.f32 %v2304, %v2316
        %v2325 = vadd.f32 %v2305, %v2316
        %v2326 = vadd.f32 %v2306, %v2316
        %v2327 = vadd.f32 %v2307, %v2316
        %v2328 = vadd.f32 %v2308, %v2316
        %v2329 = vadd.f32 %v2309, %v2316
        %v2330 = vadd.f32 %v2310, %v2316
        %v2331 = vadd.f32 %v2311, %v2316
        %v2332 = vadd.f32 %v2312, %v2316
        %v2333 = vadd.f32 %v2313, %v2316
        %v2334 = vmax.f32 %v2318, 0.0
        %v2335 = vmax.f32 %v2319, 0.0
        %v2336 = vmax.f32 %v2320, 0.0
        %v2337 = vmax.f32 %v2321, 0.0
        %v2338 = vmax.f32 %v2322, 0.0
        %v2339 = vmax.f32 %v2323, 0.0
        %v2340 = vmax.f32 %v2324, 0.0
        %v2341 = vmax.f32 %v2325, 0.0
        %v2342 = vmax.f32 %v2326, 0.0
        %v2343 = vmax.f32 %v2327, 0.0
        %v2344 = vmax.f32 %v2328, 0.0
        %v2345 = vmax.f32 %v2329, 0.0
        %v2346 = vmax.f32 %v2330, 0.0
        %v2347 = vmax.f32 %v2331, 0.0
        %v2348 = vmax.f32 %v2332, 0.0
        %v2349 = vmax.f32 %v2333, 0.0
        %v2350 = vpack.c.bf16 %v2335, %v2334
        %v2351 = vpack.c.bf16 %v2337, %v2336
        %v2352 = vpack.c.bf16 %v2339, %v2338
        %v2353 = vpack.c.bf16 %v2341, %v2340
        %v2354 = vpack.c.bf16 %v2343, %v2342
        %v2355 = vpack.c.bf16 %v2345, %v2344
        %v2356 = vpack.c.bf16 %v2347, %v2346
        %v2357 = vpack.c.bf16 %v2349, %v2348
        %v2358 = vld [vmem:[%s3] sm:$0xf]
        %v2359 = vld [vmem:[%s3 + $0x4] sm:$0xf]
        %v2360 = vld [vmem:[%s3 + $0x8] sm:$0xf]
        %v2361 = vld [vmem:[%s3 + $0xc] sm:$0xf]
        %v2362 = vld [vmem:[%s4] sm:$0x1]
        %v2364 = vperm.slane %v2362, 0
        %v2370 = vunpack.c.l.b16 %v2358
        %v2371 = vunpack.c.l.b16 %v2359
        %v2372 = vunpack.c.l.b16 %v2360
        %v2373 = vunpack.c.l.b16 %v2361
        %v2374 = vpack.c.b16 %v2371, %v2370
        %v2375 = vpack.c.b16 %v2373, %v2372
        %vm2378 = vcmask 261120
        %v2380 = vsel %vm2378, %v2350, 0
        %v2383 = vsel %vm2378, %v2351, 0
        %v2386 = vsel %vm2378, %v2352, 0
        %v2389 = vsel %vm2378, %v2353, 0
        %v2392 = vsel %vm2378, %v2354, 0
        %v2395 = vsel %vm2378, %v2355, 0
        %v2398 = vsel %vm2378, %v2356, 0
        %v2401 = vsel %vm2378, %v2357, 0
        %2403 = vmatpush.bf16.msra.mxu0 0
        %2404 = vmatpush.bf16.msra.mxu0 0
        %2405 = vmatpush.bf16.msra.mxu0 0
        %2406 = vmatpush.bf16.msra.mxu0 0
        %2407 = vmatpush.bf16.msra.mxu0 0
        %2408 = vmatpush.bf16.msra.mxu0 0
        %2409 = vmatpush.bf16.msra.mxu0 %v2375
        %2410 = vmatpush.bf16.msra.mxu0 %v2374
        %2411 = vmatmul.bf16.gmra.mxu0 %v2380
        %v2412 = vpop.f32.mrf.mxu0
        %v2413 = vadd.f32 %v2364, %v2412
        %v2414 = vpop.f32.mrf.mxu0
        %v2415 = vadd.f32 %v2364, %v2414
        %2416 = vmatmul.bf16.gmra.mxu0 %v2383
        %v2417 = vpop.f32.mrf.mxu0
        %v2418 = vadd.f32 %v2364, %v2417
        %v2419 = vpop.f32.mrf.mxu0
        %v2420 = vadd.f32 %v2364, %v2419
        %2421 = vmatmul.bf16.gmra.mxu0 %v2386
        %v2422 = vpop.f32.mrf.mxu0
        %v2423 = vadd.f32 %v2364, %v2422
        %v2424 = vpop.f32.mrf.mxu0
        %v2425 = vadd.f32 %v2364, %v2424
        %2426 = vmatmul.bf16.gmra.mxu0 %v2389
        %v2427 = vpop.f32.mrf.mxu0
        %v2428 = vadd.f32 %v2364, %v2427
        %v2429 = vpop.f32.mrf.mxu0
        %v2430 = vadd.f32 %v2364, %v2429
        %2431 = vmatmul.bf16.gmra.mxu0 %v2392
        %v2432 = vpop.f32.mrf.mxu0
        %v2433 = vadd.f32 %v2364, %v2432
        %v2434 = vpop.f32.mrf.mxu0
        %v2435 = vadd.f32 %v2364, %v2434
        %2436 = vmatmul.bf16.gmra.mxu0 %v2395
        %v2437 = vpop.f32.mrf.mxu0
        %v2438 = vadd.f32 %v2364, %v2437
        %v2439 = vpop.f32.mrf.mxu0
        %v2440 = vadd.f32 %v2364, %v2439
        %2441 = vmatmul.bf16.gmra.mxu0 %v2398
        %v2442 = vpop.f32.mrf.mxu0
        %v2443 = vadd.f32 %v2364, %v2442
        %v2444 = vpop.f32.mrf.mxu0
        %v2445 = vadd.f32 %v2364, %v2444
        %2446 = vmatmul.bf16.gmra.mxu0 %v2401
        %v2447 = vpop.f32.mrf.mxu0
        %v2448 = vadd.f32 %v2364, %v2447
        %v2449 = vpop.f32.mrf.mxu0
        %v2450 = vadd.f32 %v2364, %v2449
        %2451 = vdwg.mxu0
        %2468 = vrot.lane.b32.xlu0 %v2413, 119
        %v2469 = vpop.permute.xlu0 %2468
        %2470 = vrot.lane.b32.xlu0 %v2415, 119
        %v2471 = vpop.permute.xlu0 %2470
        %2472 = vrot.lane.b32.xlu0 %v2418, 119
        %v2473 = vpop.permute.xlu0 %2472
        %2474 = vrot.lane.b32.xlu0 %v2420, 119
        %v2475 = vpop.permute.xlu0 %2474
        %2476 = vrot.lane.b32.xlu0 %v2423, 119
        %v2477 = vpop.permute.xlu0 %2476
        %2478 = vrot.lane.b32.xlu0 %v2425, 119
        %v2479 = vpop.permute.xlu0 %2478
        %2480 = vrot.lane.b32.xlu0 %v2428, 119
        %v2481 = vpop.permute.xlu0 %2480
        %2482 = vrot.lane.b32.xlu0 %v2430, 119
        %v2483 = vpop.permute.xlu0 %2482
        %2484 = vrot.lane.b32.xlu0 %v2433, 119
        %v2485 = vpop.permute.xlu0 %2484
        %2486 = vrot.lane.b32.xlu0 %v2435, 119
        %v2487 = vpop.permute.xlu0 %2486
        %2488 = vrot.lane.b32.xlu0 %v2438, 119
        %v2489 = vpop.permute.xlu0 %2488
        %2490 = vrot.lane.b32.xlu0 %v2440, 119
        %v2491 = vpop.permute.xlu0 %2490
        %2492 = vrot.lane.b32.xlu0 %v2443, 119
        %v2493 = vpop.permute.xlu0 %2492
        %2494 = vrot.lane.b32.xlu0 %v2445, 119
        %v2495 = vpop.permute.xlu0 %2494
        %2496 = vrot.lane.b32.xlu0 %v2448, 119
        %v2497 = vpop.permute.xlu0 %2496
        %2498 = vrot.lane.b32.xlu0 %v2450, 119
        %v2499 = vpop.permute.xlu0 %2498
        %v2516 = vsub.f32 %v2413, %v2469
        %v2517 = vsub.f32 %v2415, %v2471
        %v2518 = vsub.f32 %v2418, %v2473
        %v2519 = vsub.f32 %v2420, %v2475
        %v2520 = vsub.f32 %v2423, %v2477
        %v2521 = vsub.f32 %v2425, %v2479
        %v2522 = vsub.f32 %v2428, %v2481
        %v2523 = vsub.f32 %v2430, %v2483
        %v2524 = vsub.f32 %v2433, %v2485
        %v2525 = vsub.f32 %v2435, %v2487
        %v2526 = vsub.f32 %v2438, %v2489
        %v2527 = vsub.f32 %v2440, %v2491
        %v2528 = vsub.f32 %v2443, %v2493
        %v2529 = vsub.f32 %v2445, %v2495
        %v2530 = vsub.f32 %v2448, %v2497
        %v2531 = vsub.f32 %v2450, %v2499
        %v2532 = vmul.f32 %v2516, 1.442695
        %v2533 = vpow.pop %v2532
        %v2534 = vmul.f32 %v2517, 1.442695
        %v2535 = vpow.pop %v2534
        %v2536 = vmul.f32 %v2518, 1.442695
        %v2537 = vpow.pop %v2536
        %v2538 = vmul.f32 %v2519, 1.442695
        %v2539 = vpow.pop %v2538
        %v2540 = vmul.f32 %v2520, 1.442695
        %v2541 = vpow.pop %v2540
        %v2542 = vmul.f32 %v2521, 1.442695
        %v2543 = vpow.pop %v2542
        %v2544 = vmul.f32 %v2522, 1.442695
        %v2545 = vpow.pop %v2544
        %v2546 = vmul.f32 %v2523, 1.442695
        %v2547 = vpow.pop %v2546
        %v2548 = vmul.f32 %v2524, 1.442695
        %v2549 = vpow.pop %v2548
        %v2550 = vmul.f32 %v2525, 1.442695
        %v2551 = vpow.pop %v2550
        %v2552 = vmul.f32 %v2526, 1.442695
        %v2553 = vpow.pop %v2552
        %v2554 = vmul.f32 %v2527, 1.442695
        %v2555 = vpow.pop %v2554
        %v2556 = vmul.f32 %v2528, 1.442695
        %v2557 = vpow.pop %v2556
        %v2558 = vmul.f32 %v2529, 1.442695
        %v2559 = vpow.pop %v2558
        %v2560 = vmul.f32 %v2530, 1.442695
        %v2561 = vpow.pop %v2560
        %v2562 = vmul.f32 %v2531, 1.442695
        %v2563 = vpow.pop %v2562
        %v2564 = vadd.f32 %v2533, 1.0
        %v2565 = vadd.f32 %v2535, 1.0
        %v2566 = vadd.f32 %v2537, 1.0
        %v2567 = vadd.f32 %v2539, 1.0
        %v2568 = vadd.f32 %v2541, 1.0
        %v2569 = vadd.f32 %v2543, 1.0
        %v2570 = vadd.f32 %v2545, 1.0
        %v2571 = vadd.f32 %v2547, 1.0
        %v2572 = vadd.f32 %v2549, 1.0
        %v2573 = vadd.f32 %v2551, 1.0
        %v2574 = vadd.f32 %v2553, 1.0
        %v2575 = vadd.f32 %v2555, 1.0
        %v2576 = vadd.f32 %v2557, 1.0
        %v2577 = vadd.f32 %v2559, 1.0
        %v2578 = vadd.f32 %v2561, 1.0
        %v2579 = vadd.f32 %v2563, 1.0
        %v2580 = vrcp.pop %v2564
        %v2581 = vmul.f32 %v2564, %v2580
        %v2582 = vsub.f32 1.0, %v2581
        %v2583 = vmul.f32 %v2580, %v2582
        %v2584 = vadd.f32 %v2580, %v2583
        %vm2585 = vweird.f32 %v2564
        %vm2586 = vweird.f32 %v2580
        %vm2587 = vmor %vm2585, %vm2586
        %v2588 = vsel %vm2587, %v2580, %v2584
        %v2589 = vand.u32 2147483647, %v2564
        %vm2590 = vcmp.eq.f32.partialorder %v2589, 8.507059e+37
        %v2591 = vand.u32 %v2564, 2147483648
        %v2592 = vor.u32 1.1754944e-38, %v2591
        %v2593 = vsel %vm2590, %v2592, %v2588
        %v2594 = vmul.f32 1.0, %v2593
        %v2595 = vrcp.pop %v2565
        %v2596 = vmul.f32 %v2565, %v2595
        %v2597 = vsub.f32 1.0, %v2596
        %v2598 = vmul.f32 %v2595, %v2597
        %v2599 = vadd.f32 %v2595, %v2598
        %vm2600 = vweird.f32 %v2565
        %vm2601 = vweird.f32 %v2595
        %vm2602 = vmor %vm2600, %vm2601
        %v2603 = vsel %vm2602, %v2595, %v2599
        %v2604 = vand.u32 2147483647, %v2565
        %vm2605 = vcmp.eq.f32.partialorder %v2604, 8.507059e+37
        %v2606 = vand.u32 %v2565, 2147483648
        %v2607 = vor.u32 1.1754944e-38, %v2606
        %v2608 = vsel %vm2605, %v2607, %v2603
        %v2609 = vmul.f32 1.0, %v2608
        %v2610 = vrcp.pop %v2566
        %v2611 = vmul.f32 %v2566, %v2610
        %v2612 = vsub.f32 1.0, %v2611
        %v2613 = vmul.f32 %v2610, %v2612
        %v2614 = vadd.f32 %v2610, %v2613
        %vm2615 = vweird.f32 %v2566
        %vm2616 = vweird.f32 %v2610
        %vm2617 = vmor %vm2615, %vm2616
        %v2618 = vsel %vm2617, %v2610, %v2614
        %v2619 = vand.u32 2147483647, %v2566
        %vm2620 = vcmp.eq.f32.partialorder %v2619, 8.507059e+37
        %v2621 = vand.u32 %v2566, 2147483648
        %v2622 = vor.u32 1.1754944e-38, %v2621
        %v2623 = vsel %vm2620, %v2622, %v2618
        %v2624 = vmul.f32 1.0, %v2623
        %v2625 = vrcp.pop %v2567
        %v2626 = vmul.f32 %v2567, %v2625
        %v2627 = vsub.f32 1.0, %v2626
        %v2628 = vmul.f32 %v2625, %v2627
        %v2629 = vadd.f32 %v2625, %v2628
        %vm2630 = vweird.f32 %v2567
        %vm2631 = vweird.f32 %v2625
        %vm2632 = vmor %vm2630, %vm2631
        %v2633 = vsel %vm2632, %v2625, %v2629
        %v2634 = vand.u32 2147483647, %v2567
        %vm2635 = vcmp.eq.f32.partialorder %v2634, 8.507059e+37
        %v2636 = vand.u32 %v2567, 2147483648
        %v2637 = vor.u32 1.1754944e-38, %v2636
        %v2638 = vsel %vm2635, %v2637, %v2633
        %v2639 = vmul.f32 1.0, %v2638
        %v2640 = vrcp.pop %v2568
        %v2641 = vmul.f32 %v2568, %v2640
        %v2642 = vsub.f32 1.0, %v2641
        %v2643 = vmul.f32 %v2640, %v2642
        %v2644 = vadd.f32 %v2640, %v2643
        %vm2645 = vweird.f32 %v2568
        %vm2646 = vweird.f32 %v2640
        %vm2647 = vmor %vm2645, %vm2646
        %v2648 = vsel %vm2647, %v2640, %v2644
        %v2649 = vand.u32 2147483647, %v2568
        %vm2650 = vcmp.eq.f32.partialorder %v2649, 8.507059e+37
        %v2651 = vand.u32 %v2568, 2147483648
        %v2652 = vor.u32 1.1754944e-38, %v2651
        %v2653 = vsel %vm2650, %v2652, %v2648
        %v2654 = vmul.f32 1.0, %v2653
        %v2655 = vrcp.pop %v2569
        %v2656 = vmul.f32 %v2569, %v2655
        %v2657 = vsub.f32 1.0, %v2656
        %v2658 = vmul.f32 %v2655, %v2657
        %v2659 = vadd.f32 %v2655, %v2658
        %vm2660 = vweird.f32 %v2569
        %vm2661 = vweird.f32 %v2655
        %vm2662 = vmor %vm2660, %vm2661
        %v2663 = vsel %vm2662, %v2655, %v2659
        %v2664 = vand.u32 2147483647, %v2569
        %vm2665 = vcmp.eq.f32.partialorder %v2664, 8.507059e+37
        %v2666 = vand.u32 %v2569, 2147483648
        %v2667 = vor.u32 1.1754944e-38, %v2666
        %v2668 = vsel %vm2665, %v2667, %v2663
        %v2669 = vmul.f32 1.0, %v2668
        %v2670 = vrcp.pop %v2570
        %v2671 = vmul.f32 %v2570, %v2670
        %v2672 = vsub.f32 1.0, %v2671
        %v2673 = vmul.f32 %v2670, %v2672
        %v2674 = vadd.f32 %v2670, %v2673
        %vm2675 = vweird.f32 %v2570
        %vm2676 = vweird.f32 %v2670
        %vm2677 = vmor %vm2675, %vm2676
        %v2678 = vsel %vm2677, %v2670, %v2674
        %v2679 = vand.u32 2147483647, %v2570
        %vm2680 = vcmp.eq.f32.partialorder %v2679, 8.507059e+37
        %v2681 = vand.u32 %v2570, 2147483648
        %v2682 = vor.u32 1.1754944e-38, %v2681
        %v2683 = vsel %vm2680, %v2682, %v2678
        %v2684 = vmul.f32 1.0, %v2683
        %v2685 = vrcp.pop %v2571
        %v2686 = vmul.f32 %v2571, %v2685
        %v2687 = vsub.f32 1.0, %v2686
        %v2688 = vmul.f32 %v2685, %v2687
        %v2689 = vadd.f32 %v2685, %v2688
        %vm2690 = vweird.f32 %v2571
        %vm2691 = vweird.f32 %v2685
        %vm2692 = vmor %vm2690, %vm2691
        %v2693 = vsel %vm2692, %v2685, %v2689
        %v2694 = vand.u32 2147483647, %v2571
        %vm2695 = vcmp.eq.f32.partialorder %v2694, 8.507059e+37
        %v2696 = vand.u32 %v2571, 2147483648
        %v2697 = vor.u32 1.1754944e-38, %v2696
        %v2698 = vsel %vm2695, %v2697, %v2693
        %v2699 = vmul.f32 1.0, %v2698
        %v2700 = vrcp.pop %v2572
        %v2701 = vmul.f32 %v2572, %v2700
        %v2702 = vsub.f32 1.0, %v2701
        %v2703 = vmul.f32 %v2700, %v2702
        %v2704 = vadd.f32 %v2700, %v2703
        %vm2705 = vweird.f32 %v2572
        %vm2706 = vweird.f32 %v2700
        %vm2707 = vmor %vm2705, %vm2706
        %v2708 = vsel %vm2707, %v2700, %v2704
        %v2709 = vand.u32 2147483647, %v2572
        %vm2710 = vcmp.eq.f32.partialorder %v2709, 8.507059e+37
        %v2711 = vand.u32 %v2572, 2147483648
        %v2712 = vor.u32 1.1754944e-38, %v2711
        %v2713 = vsel %vm2710, %v2712, %v2708
        %v2714 = vmul.f32 1.0, %v2713
        %v2715 = vrcp.pop %v2573
        %v2716 = vmul.f32 %v2573, %v2715
        %v2717 = vsub.f32 1.0, %v2716
        %v2718 = vmul.f32 %v2715, %v2717
        %v2719 = vadd.f32 %v2715, %v2718
        %vm2720 = vweird.f32 %v2573
        %vm2721 = vweird.f32 %v2715
        %vm2722 = vmor %vm2720, %vm2721
        %v2723 = vsel %vm2722, %v2715, %v2719
        %v2724 = vand.u32 2147483647, %v2573
        %vm2725 = vcmp.eq.f32.partialorder %v2724, 8.507059e+37
        %v2726 = vand.u32 %v2573, 2147483648
        %v2727 = vor.u32 1.1754944e-38, %v2726
        %v2728 = vsel %vm2725, %v2727, %v2723
        %v2729 = vmul.f32 1.0, %v2728
        %v2730 = vrcp.pop %v2574
        %v2731 = vmul.f32 %v2574, %v2730
        %v2732 = vsub.f32 1.0, %v2731
        %v2733 = vmul.f32 %v2730, %v2732
        %v2734 = vadd.f32 %v2730, %v2733
        %vm2735 = vweird.f32 %v2574
        %vm2736 = vweird.f32 %v2730
        %vm2737 = vmor %vm2735, %vm2736
        %v2738 = vsel %vm2737, %v2730, %v2734
        %v2739 = vand.u32 2147483647, %v2574
        %vm2740 = vcmp.eq.f32.partialorder %v2739, 8.507059e+37
        %v2741 = vand.u32 %v2574, 2147483648
        %v2742 = vor.u32 1.1754944e-38, %v2741
        %v2743 = vsel %vm2740, %v2742, %v2738
        %v2744 = vmul.f32 1.0, %v2743
        %v2745 = vrcp.pop %v2575
        %v2746 = vmul.f32 %v2575, %v2745
        %v2747 = vsub.f32 1.0, %v2746
        %v2748 = vmul.f32 %v2745, %v2747
        %v2749 = vadd.f32 %v2745, %v2748
        %vm2750 = vweird.f32 %v2575
        %vm2751 = vweird.f32 %v2745
        %vm2752 = vmor %vm2750, %vm2751
        %v2753 = vsel %vm2752, %v2745, %v2749
        %v2754 = vand.u32 2147483647, %v2575
        %vm2755 = vcmp.eq.f32.partialorder %v2754, 8.507059e+37
        %v2756 = vand.u32 %v2575, 2147483648
        %v2757 = vor.u32 1.1754944e-38, %v2756
        %v2758 = vsel %vm2755, %v2757, %v2753
        %v2759 = vmul.f32 1.0, %v2758
        %v2760 = vrcp.pop %v2576
        %v2761 = vmul.f32 %v2576, %v2760
        %v2762 = vsub.f32 1.0, %v2761
        %v2763 = vmul.f32 %v2760, %v2762
        %v2764 = vadd.f32 %v2760, %v2763
        %vm2765 = vweird.f32 %v2576
        %vm2766 = vweird.f32 %v2760
        %vm2767 = vmor %vm2765, %vm2766
        %v2768 = vsel %vm2767, %v2760, %v2764
        %v2769 = vand.u32 2147483647, %v2576
        %vm2770 = vcmp.eq.f32.partialorder %v2769, 8.507059e+37
        %v2771 = vand.u32 %v2576, 2147483648
        %v2772 = vor.u32 1.1754944e-38, %v2771
        %v2773 = vsel %vm2770, %v2772, %v2768
        %v2774 = vmul.f32 1.0, %v2773
        %v2775 = vrcp.pop %v2577
        %v2776 = vmul.f32 %v2577, %v2775
        %v2777 = vsub.f32 1.0, %v2776
        %v2778 = vmul.f32 %v2775, %v2777
        %v2779 = vadd.f32 %v2775, %v2778
        %vm2780 = vweird.f32 %v2577
        %vm2781 = vweird.f32 %v2775
        %vm2782 = vmor %vm2780, %vm2781
        %v2783 = vsel %vm2782, %v2775, %v2779
        %v2784 = vand.u32 2147483647, %v2577
        %vm2785 = vcmp.eq.f32.partialorder %v2784, 8.507059e+37
        %v2786 = vand.u32 %v2577, 2147483648
        %v2787 = vor.u32 1.1754944e-38, %v2786
        %v2788 = vsel %vm2785, %v2787, %v2783
        %v2789 = vmul.f32 1.0, %v2788
        %v2790 = vrcp.pop %v2578
        %v2791 = vmul.f32 %v2578, %v2790
        %v2792 = vsub.f32 1.0, %v2791
        %v2793 = vmul.f32 %v2790, %v2792
        %v2794 = vadd.f32 %v2790, %v2793
        %vm2795 = vweird.f32 %v2578
        %vm2796 = vweird.f32 %v2790
        %vm2797 = vmor %vm2795, %vm2796
        %v2798 = vsel %vm2797, %v2790, %v2794
        %v2799 = vand.u32 2147483647, %v2578
        %vm2800 = vcmp.eq.f32.partialorder %v2799, 8.507059e+37
        %v2801 = vand.u32 %v2578, 2147483648
        %v2802 = vor.u32 1.1754944e-38, %v2801
        %v2803 = vsel %vm2800, %v2802, %v2798
        %v2804 = vmul.f32 1.0, %v2803
        %v2805 = vrcp.pop %v2579
        %v2806 = vmul.f32 %v2579, %v2805
        %v2807 = vsub.f32 1.0, %v2806
        %v2808 = vmul.f32 %v2805, %v2807
        %v2809 = vadd.f32 %v2805, %v2808
        %vm2810 = vweird.f32 %v2579
        %vm2811 = vweird.f32 %v2805
        %vm2812 = vmor %vm2810, %vm2811
        %v2813 = vsel %vm2812, %v2805, %v2809
        %v2814 = vand.u32 2147483647, %v2579
        %vm2815 = vcmp.eq.f32.partialorder %v2814, 8.507059e+37
        %v2816 = vand.u32 %v2579, 2147483648
        %v2817 = vor.u32 1.1754944e-38, %v2816
        %v2818 = vsel %vm2815, %v2817, %v2813
        %v2819 = vmul.f32 1.0, %v2818
        %2836 = vrot.lane.b32.xlu0 %v2594, 83
        %v2837 = vpop.permute.xlu0 %2836
        %2838 = vrot.lane.b32.xlu0 %v2609, 83
        %v2839 = vpop.permute.xlu0 %2838
        %2840 = vrot.lane.b32.xlu0 %v2624, 83
        %v2841 = vpop.permute.xlu0 %2840
        %2842 = vrot.lane.b32.xlu0 %v2639, 83
        %v2843 = vpop.permute.xlu0 %2842
        %2844 = vrot.lane.b32.xlu0 %v2654, 83
        %v2845 = vpop.permute.xlu0 %2844
        %2846 = vrot.lane.b32.xlu0 %v2669, 83
        %v2847 = vpop.permute.xlu0 %2846
        %2848 = vrot.lane.b32.xlu0 %v2684, 83
        %v2849 = vpop.permute.xlu0 %2848
        %2850 = vrot.lane.b32.xlu0 %v2699, 83
        %v2851 = vpop.permute.xlu0 %2850
        %2852 = vrot.lane.b32.xlu0 %v2714, 83
        %v2853 = vpop.permute.xlu0 %2852
        %2854 = vrot.lane.b32.xlu0 %v2729, 83
        %v2855 = vpop.permute.xlu0 %2854
        %2856 = vrot.lane.b32.xlu0 %v2744, 83
        %v2857 = vpop.permute.xlu0 %2856
        %2858 = vrot.lane.b32.xlu0 %v2759, 83
        %v2859 = vpop.permute.xlu0 %2858
        %2860 = vrot.lane.b32.xlu0 %v2774, 83
        %v2861 = vpop.permute.xlu0 %2860
        %2862 = vrot.lane.b32.xlu0 %v2789, 83
        %v2863 = vpop.permute.xlu0 %2862
        %2864 = vrot.lane.b32.xlu0 %v2804, 83
        %v2865 = vpop.permute.xlu0 %2864
        %2866 = vrot.lane.b32.xlu0 %v2819, 83
        %v2867 = vpop.permute.xlu0 %2866
        %vm2884 = vcmask 973824
        %v2885 = vsel %vm2884, %v2413, %v2837
        %v2886 = vsel %vm2884, %v2415, %v2839
        %v2887 = vsel %vm2884, %v2418, %v2841
        %v2888 = vsel %vm2884, %v2420, %v2843
        %v2889 = vsel %vm2884, %v2423, %v2845
        %v2890 = vsel %vm2884, %v2425, %v2847
        %v2891 = vsel %vm2884, %v2428, %v2849
        %v2892 = vsel %vm2884, %v2430, %v2851
        %v2893 = vsel %vm2884, %v2433, %v2853
        %v2894 = vsel %vm2884, %v2435, %v2855
        %v2895 = vsel %vm2884, %v2438, %v2857
        %v2896 = vsel %vm2884, %v2440, %v2859
        %v2897 = vsel %vm2884, %v2443, %v2861
        %v2898 = vsel %vm2884, %v2445, %v2863
        %v2899 = vsel %vm2884, %v2448, %v2865
        %v2900 = vsel %vm2884, %v2450, %v2867
        %2901 = vst [vmem:[%s243] sm:$0xff] %v2885
        %2902 = vst [vmem:[%s243 + $0x8] sm:$0xff] %v2886
        %2903 = vst [vmem:[%s243 + $0x10] sm:$0xff] %v2887
        %2904 = vst [vmem:[%s243 + $0x18] sm:$0xff] %v2888
        %2905 = vst [vmem:[%s243 + $0x20] sm:$0xff] %v2889
        %2906 = vst [vmem:[%s243 + $0x28] sm:$0xff] %v2890
        %2907 = vst [vmem:[%s243 + $0x30] sm:$0xff] %v2891
        %2908 = vst [vmem:[%s243 + $0x38] sm:$0xff] %v2892
        %2909 = vst [vmem:[%s243 + $0x40] sm:$0xff] %v2893
        %2910 = vst [vmem:[%s243 + $0x48] sm:$0xff] %v2894
        %2911 = vst [vmem:[%s243 + $0x50] sm:$0xff] %v2895
        %2912 = vst [vmem:[%s243 + $0x58] sm:$0xff] %v2896
        %2913 = vst [vmem:[%s243 + $0x60] sm:$0xff] %v2897
        %2914 = vst [vmem:[%s243 + $0x68] sm:$0xff] %v2898
        %2915 = vst [vmem:[%s243 + $0x70] sm:$0xff] %v2899
        %2916 = vst [vmem:[%s243 + $0x78] sm:$0xff] %v2900
        %s2917 = sand.u32 %s157, 1
        %s2918 = scalar_lea.sflag [#allocation3], %s2917
        %s2919 = sand.u32 %s157, 1
        %s2920 = smul.addr %s2919, 128
        %s2921 = scalar_lea.vmem [#allocation2], %s2920
        // Predicated region
        $region41: #{tpu_custom_call.1} parent=39 // pred_check
          %p2922 = pneg %p167
        $region42: #{tpu_custom_call.1} parent=39 // pred_check_branch
          %2924 = sbr.rel (%p2922) target = $region44
        $region43: #{tpu_custom_call.1} parent=39 // pred_region
          %s2925 = smul.u32 %s23, 2
          %s2926 = sadd.s32 %s2925, %s24
          %2928 = vsyncadd %s2918, 0
          %s2929 = smul.addr %s2926, 16
          %s2930 = smul.addr %s2929, 8
          %s2931 = scalar_lea.hbm %s5, %s2930
          %s2932 = sshll.u32 %s2921, 4
          %s2933 = int_to_ptr.vmem [resolvable:$true] %s2932
          %s2934 = sshll.u32 %s2931, 4
          %s2935 = int_to_ptr.hbm [resolvable:$true] %s2934
          %2940 = dma.vmem_to_hbm [thread:$0]  %s2933, 2048, %s2935, %s2918, 128, 128, 8
        $region44: #{tpu_custom_call.1} parent=39 // pred_fallthru
          _
      $region40: #{tpu_custom_call.1} parent=5 // pred_fallthru
        _
      %p2941 = scmp.le.s32.totalorder 2, %s14
      // Predicated region
      $region45: #{tpu_custom_call.1} parent=5 // pred_check
        %p2942 = pneg %p2941
      $region46: #{tpu_custom_call.1} parent=5 // pred_check_branch
        %2944 = sbr.rel (%p2942) target = $region48
      $region47: #{tpu_custom_call.1} parent=5 // pred_region
        %s2945 = ssub.s32 %s14, 2
        // Predicated region
        $region49: #{tpu_custom_call.1} parent=47 // pred_check
          %p2946 = pneg %p173
        $region50: #{tpu_custom_call.1} parent=47 // pred_check_branch
          %2948 = sbr.rel (%p2946) target = $region52
        $region51: #{tpu_custom_call.1} parent=47 // pred_region
          %s2949 = sand.u32 %s158, 1
          %s2950 = scalar_lea.sflag [#allocation3], %s2949
          %s2951 = sand.u32 %s158, 1
          %s2952 = smul.addr %s2951, 128
          %s2953 = scalar_lea.vmem [#allocation2], %s2952
          %2955 = dma.done %s2950, 2048
        $region52: #{tpu_custom_call.1} parent=47 // pred_fallthru
          _
      $region48: #{tpu_custom_call.1} parent=5 // pred_fallthru
        _
    $region6: #{tpu_custom_call.1} parent=1 // loop_footer
      %s18 = sadd.s32 1, %s14
    $region7: #{tpu_custom_call.1} parent=1 // loop_footer_branch
      %13 = sbr.rel target = $region3
    $region8: #{tpu_custom_call.1} parent=1 // loop_exit
      _
    %2956 = vsyncpa [#allocation3], 1
    %s2957 = scalar_lea.sflag [#allocation3], 1
    %2958 = vsyncpa %s2957, 1

</llo_original>
